<compile_context>
chip_gen: v5e
topology: v5e:2x2
jax: 0.10.0
libtpu: 0.0.40
codegen_flags: <defaults>
</compile_context>

<pallas_src>
import functools

import jax
import jax.numpy as jnp
from jax import lax
from jax.experimental import pallas as pl
from jax.experimental.pallas import tpu as pltpu

# Max number of in-flight word-row gather DMAs per grid step.
_GATHER_PIPELINE_DEPTH = 8


def layoutlm_embeddings_kernel(
    eps,
    # scalar-prefetch (SMEM)
    ids_sm_ref,       # (N_pad,) int32 word ids (full array, SMEM)
    # blocked / HBM inputs
    idx_ref,          # (TN, 8) int32 indices into the fused small table
    word_hbm_ref,     # (V, H) f32 word table, left in HBM (pl.ANY)
    table_ref,        # (SV, H) f32 fused small-embedding table (resident)
    gamma_ref,        # (1, H) f32
    beta_ref,         # (1, H) f32
    # output
    out_ref,          # (TN, H) f32
    # scratch
    wbuf_ref,         # (TN, H) f32 gathered word rows
    gather_sems,      # DMA semaphores, shape (pipe,)
):
    tn, h = wbuf_ref.shape
    sv = table_ref.shape[0]
    pipe = min(_GATHER_PIPELINE_DEPTH, tn)
    base = pl.program_id(0) * tn

    def row_copy(r, row_id, slot):
        return pltpu.make_async_copy(
            word_hbm_ref.at[pl.ds(row_id, 1), :],
            wbuf_ref.at[pl.ds(r, 1), :],
            gather_sems.at[slot])

    def start_row(r):
        row_copy(r, ids_sm_ref[base + r], r % pipe).start()

    def wait_row(r):
        row_copy(r, 0, r % pipe).wait()

    # Prologue: fill the gather pipeline.
    for r in range(pipe):          # static unroll
        start_row(r)

    # While word rows stream in from HBM, do the fused small-table lookup:
    # one multi-hot (counts, handles repeated indices) x concatenated table.
    idx = idx_ref[...]                                        # (tn, 8)
    iota = lax.broadcasted_iota(jnp.int32, (tn, sv), 1)
    counts = jnp.zeros((tn, sv), dtype=jnp.int32)
    for k in range(8):             # static, tiny
        counts = counts + (iota == idx[:, k:k + 1]).astype(jnp.int32)
    emb = jnp.dot(counts.astype(jnp.float32), table_ref[...],
                  preferred_element_type=jnp.float32)         # (tn, h)

    # Drain the gather pipeline (bounded `pipe` DMAs in flight).
    @pl.loop(0, tn)
    def _(r):
        wait_row(r)

        @pl.when(r + pipe < tn)
        def _():
            start_row(r + pipe)

    emb = emb + wbuf_ref[...]

    # LayerNorm over hidden (biased variance, matches torch BertLayerNorm).
    mean = jnp.mean(emb, axis=-1, keepdims=True)
    centered = emb - mean
    var = jnp.mean(centered * centered, axis=-1, keepdims=True)
    normed = centered * lax.rsqrt(var + eps)
    out_ref[...] = normed * gamma_ref[...] + beta_ref[...]


def layoutlm_embeddings(input_ids, bbox, params, *,
                        token_type_ids=None, position_ids=None,
                        layer_norm_eps=1e-12, row_tile=256):
    """input_ids: (B, L) int32, bbox: (B, L, 4) int32 -> (B, L, H) f32."""
    B, L = input_ids.shape
    word = params["word"].astype(jnp.float32)
    V, H = word.shape
    N = B * L

    if position_ids is None:
        position_ids = jnp.broadcast_to(
            jnp.arange(L, dtype=jnp.int32)[None, :], (B, L))
    if token_type_ids is None:
        token_type_ids = jnp.zeros_like(input_ids)

    # Fused small-embedding table: [pos; x; y; h; w; type].
    small_tabs = [params["pos"], params["x"], params["y"],
                  params["h"], params["w"], params["type"]]
    offsets, off = [], 0
    for t in small_tabs:
        offsets.append(off)
        off += t.shape[0]
    sv = off
    comb_table = jnp.concatenate(small_tabs, axis=0).astype(jnp.float32)
    off_pos, off_x, off_y, off_h, off_w, off_t = offsets

    ids = input_ids.reshape(N).astype(jnp.int32)
    pos = position_ids.reshape(N).astype(jnp.int32)
    tok = token_type_ids.reshape(N).astype(jnp.int32)
    bb = bbox.reshape(N, 4).astype(jnp.int32)
    left, upper, right, lower = bb[:, 0], bb[:, 1], bb[:, 2], bb[:, 3]

    small_idx = jnp.stack([
        pos + off_pos,
        left + off_x,
        upper + off_y,
        right + off_x,
        lower + off_y,
        (lower - upper) + off_h,
        (right - left) + off_w,
        tok + off_t,
    ], axis=-1).astype(jnp.int32)                             # (N, 8)

    # Clamp word ids so an out-of-range id cannot fault the row-gather DMA
    # (PyTorch nn.Embedding would raise on such inputs; in-range is unchanged).
    ids = jnp.clip(ids, 0, V - 1)

    # Row-tile size (multiple of 8 sublanes); pad rows so every gather is valid.
    tn = min(row_tile, max(8, N))
    tn = max(8, (tn // 8) * 8)
    n_pad = pl.cdiv(N, tn) * tn
    if n_pad != N:
        ids = jnp.pad(ids, (0, n_pad - N))
        small_idx = jnp.pad(small_idx, ((0, n_pad - N), (0, 0)))

    gamma = params["ln_gamma"].reshape(1, H).astype(jnp.float32)
    beta = params["ln_beta"].reshape(1, H).astype(jnp.float32)

    pipe = min(_GATHER_PIPELINE_DEPTH, tn)
    kernel = functools.partial(layoutlm_embeddings_kernel, layer_norm_eps)

    cost = pl.CostEstimate(
        flops=2 * n_pad * sv * H,                 # fused multi-hot matmul
        transcendentals=n_pad,                    # rsqrt per row
        bytes_accessed=4 * (n_pad * H             # word-row gather
                            + n_pad * 8           # fused indices
                            + sv * H              # fused table
                            + 2 * H               # gamma/beta
                            + n_pad * H))         # output

    out_flat = pl.pallas_call(
        kernel,
        out_shape=jax.ShapeDtypeStruct((n_pad, H), jnp.float32),
        grid_spec=pltpu.PrefetchScalarGridSpec(
            num_scalar_prefetch=1,                # word ids -> SMEM
            grid=(n_pad // tn,),
            in_specs=[
                pl.BlockSpec((tn, 8), lambda i, ids_sm: (i, 0)),   # small_idx
                pl.BlockSpec(memory_space=pl.ANY),                 # word table (HBM)
                pl.BlockSpec((sv, H), lambda i, ids_sm: (0, 0)),   # fused table (resident)
                pl.BlockSpec((1, H), lambda i, ids_sm: (0, 0)),    # gamma
                pl.BlockSpec((1, H), lambda i, ids_sm: (0, 0)),    # beta
            ],
            out_specs=pl.BlockSpec((tn, H), lambda i, ids_sm: (i, 0)),
            scratch_shapes=[
                pltpu.VMEM((tn, H), jnp.float32),                  # gathered word rows
                pltpu.SemaphoreType.DMA((pipe,)),                  # gather DMA sems
            ]),
        compiler_params=pltpu.CompilerParams(
            dimension_semantics=("parallel",)),
        cost_estimate=cost,
    )(ids, small_idx, word, comb_table, gamma, beta)

    return out_flat[:N].reshape(B, L, H)


def _reference(input_ids, bbox, params, eps=1e-12):
    B, L = input_ids.shape
    position_ids = jnp.broadcast_to(jnp.arange(L, dtype=jnp.int32)[None, :], (B, L))
    token_type_ids = jnp.zeros_like(input_ids)
    e = (params["word"][input_ids]
         + params["pos"][position_ids]
         + params["x"][bbox[:, :, 0]]
         + params["y"][bbox[:, :, 1]]
         + params["x"][bbox[:, :, 2]]
         + params["y"][bbox[:, :, 3]]
         + params["h"][bbox[:, :, 3] - bbox[:, :, 1]]
         + params["w"][bbox[:, :, 2] - bbox[:, :, 0]]
         + params["type"][token_type_ids])
    mean = jnp.mean(e, axis=-1, keepdims=True)
    var = jnp.mean((e - mean) ** 2, axis=-1, keepdims=True)
    return (e - mean) * jax.lax.rsqrt(var + eps) * params["ln_gamma"] + params["ln_beta"]


if __name__ == "__main__":
    # Small synthetic config.
    vocab_size = 64
    hidden_size = 32
    max_position_embeddings = 32
    max_2d_position_embeddings = 64
    type_vocab_size = 2
    layer_norm_eps = 1e-12

    B, L = 2, 8

    key = jax.random.PRNGKey(0)
    keys = jax.random.split(key, 12)

    def init_table(k, rows):
        return (0.02 * jax.random.normal(k, (rows, hidden_size))).astype(jnp.float32)

    word = init_table(keys[0], vocab_size)
    word = word.at[0].set(0.0)  # padding_idx=0
    params = {
        "word": word,
        "pos": init_table(keys[1], max_position_embeddings),
        "x": init_table(keys[2], max_2d_position_embeddings),
        "y": init_table(keys[3], max_2d_position_embeddings),
        "h": init_table(keys[4], max_2d_position_embeddings),
        "w": init_table(keys[5], max_2d_position_embeddings),
        "type": init_table(keys[6], type_vocab_size),
        "ln_gamma": jnp.ones((hidden_size,), jnp.float32),
        "ln_beta": jnp.zeros((hidden_size,), jnp.float32),
    }

    input_ids = jax.random.randint(keys[7], (B, L), 0, vocab_size, dtype=jnp.int32)
    xa = jax.random.randint(keys[8], (B, L), 0, max_2d_position_embeddings, dtype=jnp.int32)
    xb = jax.random.randint(keys[9], (B, L), 0, max_2d_position_embeddings, dtype=jnp.int32)
    ya = jax.random.randint(keys[10], (B, L), 0, max_2d_position_embeddings, dtype=jnp.int32)
    yb = jax.random.randint(keys[11], (B, L), 0, max_2d_position_embeddings, dtype=jnp.int32)
    bbox = jnp.stack(
        [jnp.minimum(xa, xb), jnp.minimum(ya, yb),
         jnp.maximum(xa, xb), jnp.maximum(ya, yb)], axis=-1)  # (B, L, 4)

    # row_tile=8 -> grid of 2 steps even at toy sizes (exercises the pipeline).
    out = layoutlm_embeddings(input_ids, bbox, params,
                              layer_norm_eps=layer_norm_eps, row_tile=8)
    out = jax.block_until_ready(out)

    ref = _reference(input_ids, bbox, params, eps=layer_norm_eps)
    assert out.shape == (B, L, hidden_size)
    assert jnp.allclose(out, ref, atol=1e-4, rtol=1e-4)

    print("KERNEL_OK")
</pallas_src>

<mosaic_0001>
module attributes {stable_mosaic.version = 11 : i64} {
  func.func @layoutlm_embeddings_kernel(%arg0: i32, %arg1: memref<16xi32, #tpu.memory_space<smem>>, %arg2: memref<8x8xi32, #tpu.memory_space<vmem>>, %arg3: memref<64x32xf32, #tpu.memory_space<any>>, %arg4: memref<290x32xf32, #tpu.memory_space<vmem>>, %arg5: memref<1x32xf32, #tpu.memory_space<vmem>>, %arg6: memref<1x32xf32, #tpu.memory_space<vmem>>, %arg7: memref<8x32xf32, #tpu.memory_space<vmem>>, %arg8: memref<8x32xf32, #tpu.memory_space<vmem>>, %arg9: memref<8x!tpu.dma_semaphore, #tpu.memory_space<semaphore_mem>>) attributes {dimension_semantics = [#tpu.dimension_semantics<parallel>], iteration_bounds = array<i64: 2>, scalar_prefetch = 1 : i64, scratch_operands = 2 : i64, tpu.core_type = #tpu.core_type<tc>, window_params = [{transform_indices = @transform_0, window_bounds = array<i64: 8, 8>}, {}, {pipeline_mode = #tpu.pipeline_mode<synchronous>, transform_indices = @transform_2, window_bounds = array<i64: 290, 32>}, {pipeline_mode = #tpu.pipeline_mode<synchronous>, transform_indices = @transform_3, window_bounds = array<i64: 1, 32>}, {pipeline_mode = #tpu.pipeline_mode<synchronous>, transform_indices = @transform_4, window_bounds = array<i64: 1, 32>}, {transform_indices = @transform_5, window_bounds = array<i64: 8, 32>}]} {
    %c8_i32 = arith.constant 8 : i32
    %0 = arith.muli %arg0, %c8_i32 : i32
    %c0_i32 = arith.constant 0 : i32
    %1 = arith.addi %0, %c0_i32 : i32
    %2 = arith.index_cast %1 : i32 to index
    %3 = memref.load %arg1[%2] : memref<16xi32, #tpu.memory_space<smem>>
    %c0_i32_0 = arith.constant 0 : i32
    %c0_i32_1 = arith.constant 0 : i32
    %4 = tpu.memref_slice %arg3[%3, %c0_i32_1] : memref<64x32xf32, #tpu.memory_space<any>> -> memref<1x32xf32, #tpu.memory_space<any>>
    %c0_i32_2 = arith.constant 0 : i32
    %c0_i32_3 = arith.constant 0 : i32
    %5 = tpu.memref_slice %arg8[%c0_i32_2, %c0_i32_3] : memref<8x32xf32, #tpu.memory_space<vmem>> -> memref<1x32xf32, #tpu.memory_space<vmem>>
    %6 = tpu.memref_slice %arg9[%c0_i32_0] : memref<8x!tpu.dma_semaphore, #tpu.memory_space<semaphore_mem>> -> memref<1x!tpu.dma_semaphore, #tpu.memory_space<semaphore_mem>>
    %7 = tpu.memref_squeeze %6 : memref<1x!tpu.dma_semaphore, #tpu.memory_space<semaphore_mem>> -> memref<!tpu.dma_semaphore, #tpu.memory_space<semaphore_mem>>
    tpu.enqueue_dma source(%4 : memref<1x32xf32, #tpu.memory_space<any>>) target(%5 : memref<1x32xf32, #tpu.memory_space<vmem>>) target_semaphore(%7 : memref<!tpu.dma_semaphore, #tpu.memory_space<semaphore_mem>>)
    %c1_i32 = arith.constant 1 : i32
    %8 = arith.addi %0, %c1_i32 : i32
    %9 = arith.index_cast %8 : i32 to index
    %10 = memref.load %arg1[%9] : memref<16xi32, #tpu.memory_space<smem>>
    %c1_i32_4 = arith.constant 1 : i32
    %c0_i32_5 = arith.constant 0 : i32
    %11 = tpu.memref_slice %arg3[%10, %c0_i32_5] : memref<64x32xf32, #tpu.memory_space<any>> -> memref<1x32xf32, #tpu.memory_space<any>>
    %c1_i32_6 = arith.constant 1 : i32
    %c0_i32_7 = arith.constant 0 : i32
    %12 = tpu.memref_slice %arg8[%c1_i32_6, %c0_i32_7] : memref<8x32xf32, #tpu.memory_space<vmem>> -> memref<1x32xf32, #tpu.memory_space<vmem>>
    %13 = tpu.memref_slice %arg9[%c1_i32_4] : memref<8x!tpu.dma_semaphore, #tpu.memory_space<semaphore_mem>> -> memref<1x!tpu.dma_semaphore, #tpu.memory_space<semaphore_mem>>
    %14 = tpu.memref_squeeze %13 : memref<1x!tpu.dma_semaphore, #tpu.memory_space<semaphore_mem>> -> memref<!tpu.dma_semaphore, #tpu.memory_space<semaphore_mem>>
    tpu.enqueue_dma source(%11 : memref<1x32xf32, #tpu.memory_space<any>>) target(%12 : memref<1x32xf32, #tpu.memory_space<vmem>>) target_semaphore(%14 : memref<!tpu.dma_semaphore, #tpu.memory_space<semaphore_mem>>)
    %c2_i32 = arith.constant 2 : i32
    %15 = arith.addi %0, %c2_i32 : i32
    %16 = arith.index_cast %15 : i32 to index
    %17 = memref.load %arg1[%16] : memref<16xi32, #tpu.memory_space<smem>>
    %c2_i32_8 = arith.constant 2 : i32
    %c0_i32_9 = arith.constant 0 : i32
    %18 = tpu.memref_slice %arg3[%17, %c0_i32_9] : memref<64x32xf32, #tpu.memory_space<any>> -> memref<1x32xf32, #tpu.memory_space<any>>
    %c2_i32_10 = arith.constant 2 : i32
    %c0_i32_11 = arith.constant 0 : i32
    %19 = tpu.memref_slice %arg8[%c2_i32_10, %c0_i32_11] : memref<8x32xf32, #tpu.memory_space<vmem>> -> memref<1x32xf32, #tpu.memory_space<vmem>>
    %20 = tpu.memref_slice %arg9[%c2_i32_8] : memref<8x!tpu.dma_semaphore, #tpu.memory_space<semaphore_mem>> -> memref<1x!tpu.dma_semaphore, #tpu.memory_space<semaphore_mem>>
    %21 = tpu.memref_squeeze %20 : memref<1x!tpu.dma_semaphore, #tpu.memory_space<semaphore_mem>> -> memref<!tpu.dma_semaphore, #tpu.memory_space<semaphore_mem>>
    tpu.enqueue_dma source(%18 : memref<1x32xf32, #tpu.memory_space<any>>) target(%19 : memref<1x32xf32, #tpu.memory_space<vmem>>) target_semaphore(%21 : memref<!tpu.dma_semaphore, #tpu.memory_space<semaphore_mem>>)
    %c3_i32 = arith.constant 3 : i32
    %22 = arith.addi %0, %c3_i32 : i32
    %23 = arith.index_cast %22 : i32 to index
    %24 = memref.load %arg1[%23] : memref<16xi32, #tpu.memory_space<smem>>
    %c3_i32_12 = arith.constant 3 : i32
    %c0_i32_13 = arith.constant 0 : i32
    %25 = tpu.memref_slice %arg3[%24, %c0_i32_13] : memref<64x32xf32, #tpu.memory_space<any>> -> memref<1x32xf32, #tpu.memory_space<any>>
    %c3_i32_14 = arith.constant 3 : i32
    %c0_i32_15 = arith.constant 0 : i32
    %26 = tpu.memref_slice %arg8[%c3_i32_14, %c0_i32_15] : memref<8x32xf32, #tpu.memory_space<vmem>> -> memref<1x32xf32, #tpu.memory_space<vmem>>
    %27 = tpu.memref_slice %arg9[%c3_i32_12] : memref<8x!tpu.dma_semaphore, #tpu.memory_space<semaphore_mem>> -> memref<1x!tpu.dma_semaphore, #tpu.memory_space<semaphore_mem>>
    %28 = tpu.memref_squeeze %27 : memref<1x!tpu.dma_semaphore, #tpu.memory_space<semaphore_mem>> -> memref<!tpu.dma_semaphore, #tpu.memory_space<semaphore_mem>>
    tpu.enqueue_dma source(%25 : memref<1x32xf32, #tpu.memory_space<any>>) target(%26 : memref<1x32xf32, #tpu.memory_space<vmem>>) target_semaphore(%28 : memref<!tpu.dma_semaphore, #tpu.memory_space<semaphore_mem>>)
    %c4_i32 = arith.constant 4 : i32
    %29 = arith.addi %0, %c4_i32 : i32
    %30 = arith.index_cast %29 : i32 to index
    %31 = memref.load %arg1[%30] : memref<16xi32, #tpu.memory_space<smem>>
    %c4_i32_16 = arith.constant 4 : i32
    %c0_i32_17 = arith.constant 0 : i32
    %32 = tpu.memref_slice %arg3[%31, %c0_i32_17] : memref<64x32xf32, #tpu.memory_space<any>> -> memref<1x32xf32, #tpu.memory_space<any>>
    %c4_i32_18 = arith.constant 4 : i32
    %c0_i32_19 = arith.constant 0 : i32
    %33 = tpu.memref_slice %arg8[%c4_i32_18, %c0_i32_19] : memref<8x32xf32, #tpu.memory_space<vmem>> -> memref<1x32xf32, #tpu.memory_space<vmem>>
    %34 = tpu.memref_slice %arg9[%c4_i32_16] : memref<8x!tpu.dma_semaphore, #tpu.memory_space<semaphore_mem>> -> memref<1x!tpu.dma_semaphore, #tpu.memory_space<semaphore_mem>>
    %35 = tpu.memref_squeeze %34 : memref<1x!tpu.dma_semaphore, #tpu.memory_space<semaphore_mem>> -> memref<!tpu.dma_semaphore, #tpu.memory_space<semaphore_mem>>
    tpu.enqueue_dma source(%32 : memref<1x32xf32, #tpu.memory_space<any>>) target(%33 : memref<1x32xf32, #tpu.memory_space<vmem>>) target_semaphore(%35 : memref<!tpu.dma_semaphore, #tpu.memory_space<semaphore_mem>>)
    %c5_i32 = arith.constant 5 : i32
    %36 = arith.addi %0, %c5_i32 : i32
    %37 = arith.index_cast %36 : i32 to index
    %38 = memref.load %arg1[%37] : memref<16xi32, #tpu.memory_space<smem>>
    %c5_i32_20 = arith.constant 5 : i32
    %c0_i32_21 = arith.constant 0 : i32
    %39 = tpu.memref_slice %arg3[%38, %c0_i32_21] : memref<64x32xf32, #tpu.memory_space<any>> -> memref<1x32xf32, #tpu.memory_space<any>>
    %c5_i32_22 = arith.constant 5 : i32
    %c0_i32_23 = arith.constant 0 : i32
    %40 = tpu.memref_slice %arg8[%c5_i32_22, %c0_i32_23] : memref<8x32xf32, #tpu.memory_space<vmem>> -> memref<1x32xf32, #tpu.memory_space<vmem>>
    %41 = tpu.memref_slice %arg9[%c5_i32_20] : memref<8x!tpu.dma_semaphore, #tpu.memory_space<semaphore_mem>> -> memref<1x!tpu.dma_semaphore, #tpu.memory_space<semaphore_mem>>
    %42 = tpu.memref_squeeze %41 : memref<1x!tpu.dma_semaphore, #tpu.memory_space<semaphore_mem>> -> memref<!tpu.dma_semaphore, #tpu.memory_space<semaphore_mem>>
    tpu.enqueue_dma source(%39 : memref<1x32xf32, #tpu.memory_space<any>>) target(%40 : memref<1x32xf32, #tpu.memory_space<vmem>>) target_semaphore(%42 : memref<!tpu.dma_semaphore, #tpu.memory_space<semaphore_mem>>)
    %c6_i32 = arith.constant 6 : i32
    %43 = arith.addi %0, %c6_i32 : i32
    %44 = arith.index_cast %43 : i32 to index
    %45 = memref.load %arg1[%44] : memref<16xi32, #tpu.memory_space<smem>>
    %c6_i32_24 = arith.constant 6 : i32
    %c0_i32_25 = arith.constant 0 : i32
    %46 = tpu.memref_slice %arg3[%45, %c0_i32_25] : memref<64x32xf32, #tpu.memory_space<any>> -> memref<1x32xf32, #tpu.memory_space<any>>
    %c6_i32_26 = arith.constant 6 : i32
    %c0_i32_27 = arith.constant 0 : i32
    %47 = tpu.memref_slice %arg8[%c6_i32_26, %c0_i32_27] : memref<8x32xf32, #tpu.memory_space<vmem>> -> memref<1x32xf32, #tpu.memory_space<vmem>>
    %48 = tpu.memref_slice %arg9[%c6_i32_24] : memref<8x!tpu.dma_semaphore, #tpu.memory_space<semaphore_mem>> -> memref<1x!tpu.dma_semaphore, #tpu.memory_space<semaphore_mem>>
    %49 = tpu.memref_squeeze %48 : memref<1x!tpu.dma_semaphore, #tpu.memory_space<semaphore_mem>> -> memref<!tpu.dma_semaphore, #tpu.memory_space<semaphore_mem>>
    tpu.enqueue_dma source(%46 : memref<1x32xf32, #tpu.memory_space<any>>) target(%47 : memref<1x32xf32, #tpu.memory_space<vmem>>) target_semaphore(%49 : memref<!tpu.dma_semaphore, #tpu.memory_space<semaphore_mem>>)
    %c7_i32 = arith.constant 7 : i32
    %50 = arith.addi %0, %c7_i32 : i32
    %51 = arith.index_cast %50 : i32 to index
    %52 = memref.load %arg1[%51] : memref<16xi32, #tpu.memory_space<smem>>
    %c7_i32_28 = arith.constant 7 : i32
    %c0_i32_29 = arith.constant 0 : i32
    %53 = tpu.memref_slice %arg3[%52, %c0_i32_29] : memref<64x32xf32, #tpu.memory_space<any>> -> memref<1x32xf32, #tpu.memory_space<any>>
    %c7_i32_30 = arith.constant 7 : i32
    %c0_i32_31 = arith.constant 0 : i32
    %54 = tpu.memref_slice %arg8[%c7_i32_30, %c0_i32_31] : memref<8x32xf32, #tpu.memory_space<vmem>> -> memref<1x32xf32, #tpu.memory_space<vmem>>
    %55 = tpu.memref_slice %arg9[%c7_i32_28] : memref<8x!tpu.dma_semaphore, #tpu.memory_space<semaphore_mem>> -> memref<1x!tpu.dma_semaphore, #tpu.memory_space<semaphore_mem>>
    %56 = tpu.memref_squeeze %55 : memref<1x!tpu.dma_semaphore, #tpu.memory_space<semaphore_mem>> -> memref<!tpu.dma_semaphore, #tpu.memory_space<semaphore_mem>>
    tpu.enqueue_dma source(%53 : memref<1x32xf32, #tpu.memory_space<any>>) target(%54 : memref<1x32xf32, #tpu.memory_space<vmem>>) target_semaphore(%56 : memref<!tpu.dma_semaphore, #tpu.memory_space<semaphore_mem>>)
    %c0 = arith.constant 0 : index
    %c0_32 = arith.constant 0 : index
    %57 = vector.load %arg2[%c0, %c0_32] : memref<8x8xi32, #tpu.memory_space<vmem>>, vector<8x8xi32>
    %58 = tpu.iota {dimensions = array<i32: 1>} : vector<8x290xi32>
    %c0_i32_33 = arith.constant 0 : i32
    %59 = vector.broadcast %c0_i32_33 : i32 to vector<8x290xi32>
    %60 = vector.extract_strided_slice %57 {offsets = [0, 0], sizes = [8, 1], strides = [1, 1]} : vector<8x8xi32> to vector<8x1xi32>
    %61 = vector.broadcast %60 : vector<8x1xi32> to vector<8x290xi32>
    %62 = arith.cmpi eq, %58, %61 : vector<8x290xi32>
    %63 = arith.extui %62 : vector<8x290xi1> to vector<8x290xi32>
    %64 = arith.addi %59, %63 : vector<8x290xi32>
    %65 = vector.extract_strided_slice %57 {offsets = [0, 1], sizes = [8, 1], strides = [1, 1]} : vector<8x8xi32> to vector<8x1xi32>
    %66 = vector.broadcast %65 : vector<8x1xi32> to vector<8x290xi32>
    %67 = arith.cmpi eq, %58, %66 : vector<8x290xi32>
    %68 = arith.extui %67 : vector<8x290xi1> to vector<8x290xi32>
    %69 = arith.addi %64, %68 : vector<8x290xi32>
    %70 = vector.extract_strided_slice %57 {offsets = [0, 2], sizes = [8, 1], strides = [1, 1]} : vector<8x8xi32> to vector<8x1xi32>
    %71 = vector.broadcast %70 : vector<8x1xi32> to vector<8x290xi32>
    %72 = arith.cmpi eq, %58, %71 : vector<8x290xi32>
    %73 = arith.extui %72 : vector<8x290xi1> to vector<8x290xi32>
    %74 = arith.addi %69, %73 : vector<8x290xi32>
    %75 = vector.extract_strided_slice %57 {offsets = [0, 3], sizes = [8, 1], strides = [1, 1]} : vector<8x8xi32> to vector<8x1xi32>
    %76 = vector.broadcast %75 : vector<8x1xi32> to vector<8x290xi32>
    %77 = arith.cmpi eq, %58, %76 : vector<8x290xi32>
    %78 = arith.extui %77 : vector<8x290xi1> to vector<8x290xi32>
    %79 = arith.addi %74, %78 : vector<8x290xi32>
    %80 = vector.extract_strided_slice %57 {offsets = [0, 4], sizes = [8, 1], strides = [1, 1]} : vector<8x8xi32> to vector<8x1xi32>
    %81 = vector.broadcast %80 : vector<8x1xi32> to vector<8x290xi32>
    %82 = arith.cmpi eq, %58, %81 : vector<8x290xi32>
    %83 = arith.extui %82 : vector<8x290xi1> to vector<8x290xi32>
    %84 = arith.addi %79, %83 : vector<8x290xi32>
    %85 = vector.extract_strided_slice %57 {offsets = [0, 5], sizes = [8, 1], strides = [1, 1]} : vector<8x8xi32> to vector<8x1xi32>
    %86 = vector.broadcast %85 : vector<8x1xi32> to vector<8x290xi32>
    %87 = arith.cmpi eq, %58, %86 : vector<8x290xi32>
    %88 = arith.extui %87 : vector<8x290xi1> to vector<8x290xi32>
    %89 = arith.addi %84, %88 : vector<8x290xi32>
    %90 = vector.extract_strided_slice %57 {offsets = [0, 6], sizes = [8, 1], strides = [1, 1]} : vector<8x8xi32> to vector<8x1xi32>
    %91 = vector.broadcast %90 : vector<8x1xi32> to vector<8x290xi32>
    %92 = arith.cmpi eq, %58, %91 : vector<8x290xi32>
    %93 = arith.extui %92 : vector<8x290xi1> to vector<8x290xi32>
    %94 = arith.addi %89, %93 : vector<8x290xi32>
    %95 = vector.extract_strided_slice %57 {offsets = [0, 7], sizes = [8, 1], strides = [1, 1]} : vector<8x8xi32> to vector<8x1xi32>
    %96 = vector.broadcast %95 : vector<8x1xi32> to vector<8x290xi32>
    %97 = arith.cmpi eq, %58, %96 : vector<8x290xi32>
    %98 = arith.extui %97 : vector<8x290xi1> to vector<8x290xi32>
    %99 = arith.addi %94, %98 : vector<8x290xi32>
    %100 = arith.sitofp %99 : vector<8x290xi32> to vector<8x290xf32>
    %c0_34 = arith.constant 0 : index
    %c0_35 = arith.constant 0 : index
    %101 = vector.load %arg4[%c0_34, %c0_35] : memref<290x32xf32, #tpu.memory_space<vmem>>, vector<290x32xf32>
    %cst = arith.constant dense<0.000000e+00> : vector<8x32xf32>
    %102 = tpu.matmul %100, %101, %cst {dimension_numbers = #tpu.dot_dimension_numbers<[1], [0], [0], [1], [0, 0, 1, 1], [], []>} : vector<8x290xf32>, vector<290x32xf32>, vector<8x32xf32> -> vector<8x32xf32>
    %c0_i32_36 = arith.constant 0 : i32
    %c8_i32_37 = arith.constant 8 : i32
    %103 = arith.addi %c0_i32_36, %c8_i32_37 : i32
    %c1_i32_38 = arith.constant 1 : i32
    scf.for %arg10 = %c0_i32_36 to %103 step %c1_i32_38  : i32 {
      %c1_i32_53 = arith.constant 1 : i32
      %129 = arith.muli %arg10, %c1_i32_53 : i32
      %c0_i32_54 = arith.constant 0 : i32
      %130 = arith.addi %c0_i32_54, %129 : i32
      %c8_i32_55 = arith.constant 8 : i32
      %c0_i32_56 = arith.constant 0 : i32
      %131 = arith.cmpi eq, %c8_i32_55, %c0_i32_56 : i32
      %c1_i32_57 = arith.constant 1 : i32
      %132 = arith.select %131, %c1_i32_57, %c8_i32_55 : i32
      %133 = arith.remsi %130, %132 : i32
      %c0_i32_58 = arith.constant 0 : i32
      %134 = arith.cmpi ne, %133, %c0_i32_58 : i32
      %c0_i32_59 = arith.constant 0 : i32
      %135 = arith.cmpi slt, %133, %c0_i32_59 : i32
      %c0_i32_60 = arith.constant 0 : i32
      %136 = arith.cmpi slt, %132, %c0_i32_60 : i32
      %137 = arith.xori %135, %136 : i1
      %138 = arith.andi %137, %134 : i1
      %139 = arith.addi %133, %132 : i32
      %140 = arith.select %138, %139, %133 : i32
      %c0_i32_61 = arith.constant 0 : i32
      %c0_i32_62 = arith.constant 0 : i32
      %141 = tpu.memref_slice %arg3[%c0_i32_61, %c0_i32_62] : memref<64x32xf32, #tpu.memory_space<any>> -> memref<1x32xf32, #tpu.memory_space<any>>
      %c0_i32_63 = arith.constant 0 : i32
      %142 = tpu.memref_slice %arg8[%130, %c0_i32_63] : memref<8x32xf32, #tpu.memory_space<vmem>> -> memref<1x32xf32, #tpu.memory_space<vmem>>
      %143 = tpu.memref_slice %arg9[%140] : memref<8x!tpu.dma_semaphore, #tpu.memory_space<semaphore_mem>> -> memref<1x!tpu.dma_semaphore, #tpu.memory_space<semaphore_mem>>
      %144 = tpu.memref_squeeze %143 : memref<1x!tpu.dma_semaphore, #tpu.memory_space<semaphore_mem>> -> memref<!tpu.dma_semaphore, #tpu.memory_space<semaphore_mem>>
      tpu.wait_dma2 semaphore(%144 : memref<!tpu.dma_semaphore, #tpu.memory_space<semaphore_mem>>) src(%141 : memref<1x32xf32, #tpu.memory_space<any>>) dst(%142 : memref<1x32xf32, #tpu.memory_space<vmem>>)
      %c8_i32_64 = arith.constant 8 : i32
      %145 = arith.addi %130, %c8_i32_64 : i32
      %c8_i32_65 = arith.constant 8 : i32
      %146 = arith.cmpi slt, %145, %c8_i32_65 : i32
      %147 = arith.extui %146 : i1 to i32
      %c0_i32_66 = arith.constant 0 : i32
      %148 = arith.cmpi ne, %147, %c0_i32_66 : i32
      scf.if %148 {
        %c8_i32_67 = arith.constant 8 : i32
        %149 = arith.addi %130, %c8_i32_67 : i32
        %150 = arith.addi %0, %149 : i32
        %151 = arith.index_cast %150 : i32 to index
        %152 = memref.load %arg1[%151] : memref<16xi32, #tpu.memory_space<smem>>
        %c8_i32_68 = arith.constant 8 : i32
        %c0_i32_69 = arith.constant 0 : i32
        %153 = arith.cmpi eq, %c8_i32_68, %c0_i32_69 : i32
        %c1_i32_70 = arith.constant 1 : i32
        %154 = arith.select %153, %c1_i32_70, %c8_i32_68 : i32
        %155 = arith.remsi %149, %154 : i32
        %c0_i32_71 = arith.constant 0 : i32
        %156 = arith.cmpi ne, %155, %c0_i32_71 : i32
        %c0_i32_72 = arith.constant 0 : i32
        %157 = arith.cmpi slt, %155, %c0_i32_72 : i32
        %c0_i32_73 = arith.constant 0 : i32
        %158 = arith.cmpi slt, %154, %c0_i32_73 : i32
        %159 = arith.xori %157, %158 : i1
        %160 = arith.andi %159, %156 : i1
        %161 = arith.addi %155, %154 : i32
        %162 = arith.select %160, %161, %155 : i32
        %c0_i32_74 = arith.constant 0 : i32
        %163 = tpu.memref_slice %arg3[%152, %c0_i32_74] : memref<64x32xf32, #tpu.memory_space<any>> -> memref<1x32xf32, #tpu.memory_space<any>>
        %c0_i32_75 = arith.constant 0 : i32
        %164 = tpu.memref_slice %arg8[%149, %c0_i32_75] : memref<8x32xf32, #tpu.memory_space<vmem>> -> memref<1x32xf32, #tpu.memory_space<vmem>>
        %165 = tpu.memref_slice %arg9[%162] : memref<8x!tpu.dma_semaphore, #tpu.memory_space<semaphore_mem>> -> memref<1x!tpu.dma_semaphore, #tpu.memory_space<semaphore_mem>>
        %166 = tpu.memref_squeeze %165 : memref<1x!tpu.dma_semaphore, #tpu.memory_space<semaphore_mem>> -> memref<!tpu.dma_semaphore, #tpu.memory_space<semaphore_mem>>
        tpu.enqueue_dma source(%163 : memref<1x32xf32, #tpu.memory_space<any>>) target(%164 : memref<1x32xf32, #tpu.memory_space<vmem>>) target_semaphore(%166 : memref<!tpu.dma_semaphore, #tpu.memory_space<semaphore_mem>>)
      } else {
      }
    }
    %c8_i32_39 = arith.constant 8 : i32
    %c0_40 = arith.constant 0 : index
    %c0_41 = arith.constant 0 : index
    %104 = vector.load %arg8[%c0_40, %c0_41] : memref<8x32xf32, #tpu.memory_space<vmem>>, vector<8x32xf32>
    %105 = arith.addf %102, %104 : vector<8x32xf32>
    %cst_42 = arith.constant dense<0.000000e+00> : vector<8xf32>
    %106 = vector.multi_reduction <add>, %105, %cst_42 [1] : vector<8x32xf32> to vector<8xf32>
    %107 = vector.shape_cast %106 : vector<8xf32> to vector<8x1xf32>
    %cst_43 = arith.constant 3.200000e+01 : f32
    %108 = vector.broadcast %cst_43 : f32 to vector<8x1xf32>
    %109 = arith.divf %107, %108 : vector<8x1xf32>
    %110 = vector.broadcast %109 : vector<8x1xf32> to vector<8x32xf32>
    %111 = arith.subf %105, %110 : vector<8x32xf32>
    %112 = arith.mulf %111, %111 : vector<8x32xf32>
    %cst_44 = arith.constant dense<0.000000e+00> : vector<8xf32>
    %113 = vector.multi_reduction <add>, %112, %cst_44 [1] : vector<8x32xf32> to vector<8xf32>
    %114 = vector.shape_cast %113 : vector<8xf32> to vector<8x1xf32>
    %cst_45 = arith.constant 3.200000e+01 : f32
    %115 = vector.broadcast %cst_45 : f32 to vector<8x1xf32>
    %116 = arith.divf %114, %115 : vector<8x1xf32>
    %cst_46 = arith.constant 9.99999996E-13 : f32
    %117 = vector.broadcast %cst_46 : f32 to vector<8x1xf32>
    %118 = arith.addf %116, %117 : vector<8x1xf32>
    %119 = math.rsqrt %118 : vector<8x1xf32>
    %120 = vector.broadcast %119 : vector<8x1xf32> to vector<8x32xf32>
    %121 = arith.mulf %111, %120 : vector<8x32xf32>
    %c0_47 = arith.constant 0 : index
    %c0_48 = arith.constant 0 : index
    %122 = vector.load %arg5[%c0_47, %c0_48] : memref<1x32xf32, #tpu.memory_space<vmem>>, vector<1x32xf32>
    %123 = vector.broadcast %122 : vector<1x32xf32> to vector<8x32xf32>
    %124 = arith.mulf %121, %123 : vector<8x32xf32>
    %c0_49 = arith.constant 0 : index
    %c0_50 = arith.constant 0 : index
    %125 = vector.load %arg6[%c0_49, %c0_50] : memref<1x32xf32, #tpu.memory_space<vmem>>, vector<1x32xf32>
    %126 = vector.broadcast %125 : vector<1x32xf32> to vector<8x32xf32>
    %127 = arith.addf %124, %126 : vector<8x32xf32>
    %c0_51 = arith.constant 0 : index
    %c0_52 = arith.constant 0 : index
    %128 = vector.load %arg7[%c0_51, %c0_52] : memref<8x32xf32, #tpu.memory_space<vmem>>, vector<8x32xf32>
    tpu.vector_store %arg7[%c0_51, %c0_52], %127 {strides = array<i32>} : memref<8x32xf32, #tpu.memory_space<vmem>>, vector<8x32xf32>,
    return
  }
  func.func @transform_0(%arg0: i32, %arg1: memref<16xi32, #tpu.memory_space<smem>>) -> (i32, i32) {
    %c0_i32 = arith.constant 0 : i32
    %c0_i32_0 = arith.constant 0 : i32
    return %arg0, %c0_i32 : i32, i32
  }
  func.func @transform_2(%arg0: i32, %arg1: memref<16xi32, #tpu.memory_space<smem>>) -> (i32, i32) {
    %c0_i32 = arith.constant 0 : i32
    %c0_i32_0 = arith.constant 0 : i32
    %c0_i32_1 = arith.constant 0 : i32
    return %c0_i32, %c0_i32_0 : i32, i32
  }
  func.func @transform_3(%arg0: i32, %arg1: memref<16xi32, #tpu.memory_space<smem>>) -> (i32, i32) {
    %c0_i32 = arith.constant 0 : i32
    %c0_i32_0 = arith.constant 0 : i32
    %c0_i32_1 = arith.constant 0 : i32
    return %c0_i32, %c0_i32_0 : i32, i32
  }
  func.func @transform_4(%arg0: i32, %arg1: memref<16xi32, #tpu.memory_space<smem>>) -> (i32, i32) {
    %c0_i32 = arith.constant 0 : i32
    %c0_i32_0 = arith.constant 0 : i32
    %c0_i32_1 = arith.constant 0 : i32
    return %c0_i32, %c0_i32_0 : i32, i32
  }
  func.func @transform_5(%arg0: i32, %arg1: memref<16xi32, #tpu.memory_space<smem>>) -> (i32, i32) {
    %c0_i32 = arith.constant 0 : i32
    %c0_i32_0 = arith.constant 0 : i32
    return %arg0, %c0_i32 : i32, i32
  }
}

</mosaic_0001>

<llo_original>
// kernel: tpu_custom_call.1
$region0: #{tpu_custom_call.1}
  #allocation0 [shape = 'u32[]', space=smem, size = 0x4, offset = 0x4, fixed_abs, tag = 'smem constant byte address 0x4 - core index']
  #allocation1 [shape = 'u32[72,128]{1,0:T(1,128)}', space=vmem, size = 0x9000, scoped, tag = 'internal scratch']
  #allocation2 [shape = 'f32[8,32]{1,0:T(8,128)}', space=vmem, size = 0x1000, scoped, tag = 'scratch operand']
  #allocation3 [shape = 's32[8]{0}', space=sflag, size = 0x20, scoped, tag = 'scratch operand']
  #allocation4 [shape = 's32[1]{0}', space=sflag, size = 0x4, scoped, tag = 'scoped memory for tpu_custom_call.1']
  #allocation5 [shape = 'u8[512]{0}', space=smem, size = 0x200, scoped, tag = 'prefetched SMEM operand 0']
  #allocation8 [shape = 's32[]', space=sflag, size = 0x4, offset = 0, fixed_abs, tag = 'sflag constant byte address 0x0 - dummy sync flag']
  #allocation9 [shape = 's32[]', space=sflag, size = 0x4, offset = 0, fixed_abs, tag = 'sflag constant byte address 0x0 - dummy sync flag']
  #allocation10 [shape = 's32[]', space=sflag, size = 0x4, offset = 0, fixed_abs, tag = 'sflag constant byte address 0x0 - dummy sync flag']
  #allocation11 [shape = 's32[]', space=sflag, size = 0x4, offset = 0, fixed_abs, tag = 'sflag constant byte address 0x0 - dummy sync flag']
  #allocation12 [shape = 's32[]', space=sflag, size = 0x4, offset = 0, fixed_abs, tag = 'sflag constant byte address 0x0 - dummy sync flag']
  #allocation13 [shape = 's32[]', space=sflag, size = 0x4, offset = 0, fixed_abs, tag = 'sflag constant byte address 0x0 - dummy sync flag']
  #allocation14 [shape = 's32[]', space=sflag, size = 0x4, offset = 0, fixed_abs, tag = 'sflag constant byte address 0x0 - dummy sync flag']
  #allocation15 [shape = 's32[]', space=sflag, size = 0x4, offset = 0, fixed_abs, tag = 'sflag constant byte address 0x0 - dummy sync flag']
  #allocation16 [shape = 's32[]', space=sflag, size = 0x4, offset = 0, fixed_abs, tag = 'sflag constant byte address 0x0 - dummy sync flag']
  %s0 = inlined_call_operand.vmem [shape: s32[16], index: 0, kind: input, shape index: {}]
  %s1 = inlined_call_operand.vmem [shape: s32[16,8], index: 1, kind: input, shape index: {}]
  %s2 = inlined_call_operand.vmem [shape: f32[64,32], index: 2, kind: input, shape index: {}]
  %s3 = inlined_call_operand.vmem [shape: f32[290,32], index: 3, kind: input, shape index: {}]
  %s4 = inlined_call_operand.vmem [shape: f32[1,32], index: 4, kind: input, shape index: {}]
  %s5 = inlined_call_operand.vmem [shape: f32[1,32], index: 5, kind: input, shape index: {}]
  %s6 = inlined_call_operand.hbm [shape: f32[16,32], index: 6, kind: output, shape index: {}]
  %s7 = sld [smem:[#allocation0]]
  $region330: #{tpu_custom_call.1} parent=0
    _
  %s9 = ssub.s32 1, %s7
  %s10 = scalar_select 0, %s9, %s7
  %s12 = sshll.u32 %s0, 4
  %s13 = int_to_ptr.vmem [resolvable:$true] %s12
  %15 = dma.vmem_to_smem %s13, 16, [#allocation5], [#allocation4]
  %17 = dma.done [#allocation4], 16
  %18 = sfence
  $region1: #{tpu_custom_call.1} parent=0
    #allocation6 [shape = 'u8[8192]{0}', space=vmem, size = 0x2000, scoped, tag = 'output window, operand 0']
    #allocation7 [shape = 's32[2]{0}', space=sflag, size = 0x8, scoped, tag = 'scoped memory for tpu_custom_call.1']
    %19 = vsyncpa [#allocation7], 0
    %s20 = scalar_lea.sflag [#allocation7], 1
    %21 = vsyncpa %s20, 0
    loop: start=0, step=1, limit=4
    $region2: #{tpu_custom_call.1} parent=1 // loop_pre_header
      _
    $region3: #{tpu_custom_call.1} parent=1 // loop_header
      %s23 = sphi 0, %s27
      %p24 = scmp.ge.s32.totalorder %s23, 4
      %s33 = sphi 0, %s35
      %s36 = sphi 0, %s33
      %s37 = sphi 0, %s36
      %s53 = sphi 0, %s37
      %s57 = sphi 0, %s57
      %s59 = sphi 0, %s57
      %s60 = sphi 0, %s59
      %s74 = sphi 0, %s60
      %s78 = sphi 0, %s78
      %s80 = sphi 0, %s78
      %s81 = sphi 0, %s80
      %s95 = sphi 0, %s81
      %s99 = sphi 0, %s99
      %s101 = sphi 0, %s99
      %s102 = sphi 0, %s101
      %s116 = sphi 0, %s102
      %s122 = sphi 0, %s124
      %s125 = sphi 0, %s122
      %s126 = sphi 0, %s125
      %s142 = sphi 0, %s126
    $region4: #{tpu_custom_call.1} parent=1 // loop_header_branch
      %26 = sbr.rel (%p24) target = $region8
    $region5: #{tpu_custom_call.1} parent=1 // loop_body
      %s28 = ssub.s32 %s23, 1
      %s29 = ssub.s32 %s23, 2
      %s30 = sadd.s32 %s23, 1
      %s31 = ssub.s32 %s23, %s30
      %p32 = scmp.eq.s32.totalorder %s31, 0
      %s34 = sadd.s32 %s33, 1
      %s35 = scalar_select %p32, %s33, %s34
      %p38 = pneg %p32
      %p39 = scmp.eq.s32.totalorder %s23, 1
      %p40 = por %p38, %p39
      %p41 = scmp.ne.s32.totalorder %s33, %s36
      %p42 = scmp.eq.s32.totalorder %s23, 0
      %p43 = por %p41, %p42
      %p44 = scmp.ne.s32.totalorder %s33, %s36
      %p45 = scmp.eq.s32.totalorder %s28, 1
      %p46 = por %p44, %p45
      %p47 = scmp.ne.s32.totalorder %s36, %s37
      %p48 = scmp.eq.s32.totalorder %s28, 0
      %p49 = por %p47, %p48
      %p50 = scmp.ne.s32.totalorder %s36, %s37
      %p51 = scmp.eq.s32.totalorder %s29, 1
      %p52 = por %p50, %p51
      %p54 = scmp.ne.s32.totalorder %s37, %s53
      %p55 = scmp.eq.s32.totalorder %s29, 0
      %p56 = por %p54, %p55
      %s58 = sadd.s32 %s57, 1
      %p61 = scmp.eq.s32.totalorder %s23, 1
      %p62 = scmp.ne.s32.totalorder %s57, %s59
      %p63 = scmp.eq.s32.totalorder %s23, 0
      %p64 = por %p62, %p63
      %p65 = scmp.ne.s32.totalorder %s57, %s59
      %p66 = scmp.eq.s32.totalorder %s28, 1
      %p67 = por %p65, %p66
      %p68 = scmp.ne.s32.totalorder %s59, %s60
      %p69 = scmp.eq.s32.totalorder %s28, 0
      %p70 = por %p68, %p69
      %p71 = scmp.ne.s32.totalorder %s59, %s60
      %p72 = scmp.eq.s32.totalorder %s29, 1
      %p73 = por %p71, %p72
      %p75 = scmp.ne.s32.totalorder %s60, %s74
      %p76 = scmp.eq.s32.totalorder %s29, 0
      %p77 = por %p75, %p76
      %s79 = sadd.s32 %s78, 1
      %p82 = scmp.eq.s32.totalorder %s23, 1
      %p83 = scmp.ne.s32.totalorder %s78, %s80
      %p84 = scmp.eq.s32.totalorder %s23, 0
      %p85 = por %p83, %p84
      %p86 = scmp.ne.s32.totalorder %s78, %s80
      %p87 = scmp.eq.s32.totalorder %s28, 1
      %p88 = por %p86, %p87
      %p89 = scmp.ne.s32.totalorder %s80, %s81
      %p90 = scmp.eq.s32.totalorder %s28, 0
      %p91 = por %p89, %p90
      %p92 = scmp.ne.s32.totalorder %s80, %s81
      %p93 = scmp.eq.s32.totalorder %s29, 1
      %p94 = por %p92, %p93
      %p96 = scmp.ne.s32.totalorder %s81, %s95
      %p97 = scmp.eq.s32.totalorder %s29, 0
      %p98 = por %p96, %p97
      %s100 = sadd.s32 %s99, 1
      %p103 = scmp.eq.s32.totalorder %s23, 1
      %p104 = scmp.ne.s32.totalorder %s99, %s101
      %p105 = scmp.eq.s32.totalorder %s23, 0
      %p106 = por %p104, %p105
      %p107 = scmp.ne.s32.totalorder %s99, %s101
      %p108 = scmp.eq.s32.totalorder %s28, 1
      %p109 = por %p107, %p108
      %p110 = scmp.ne.s32.totalorder %s101, %s102
      %p111 = scmp.eq.s32.totalorder %s28, 0
      %p112 = por %p110, %p111
      %p113 = scmp.ne.s32.totalorder %s101, %s102
      %p114 = scmp.eq.s32.totalorder %s29, 1
      %p115 = por %p113, %p114
      %p117 = scmp.ne.s32.totalorder %s102, %s116
      %p118 = scmp.eq.s32.totalorder %s29, 0
      %p119 = por %p117, %p118
      %s120 = ssub.s32 %s23, %s30
      %p121 = scmp.eq.s32.totalorder %s120, 0
      %s123 = sadd.s32 %s122, 1
      %s124 = scalar_select %p121, %s122, %s123
      %p127 = pneg %p121
      %p128 = scmp.eq.s32.totalorder %s23, 1
      %p129 = por %p127, %p128
      %p130 = scmp.ne.s32.totalorder %s122, %s125
      %p131 = scmp.eq.s32.totalorder %s23, 0
      %p132 = por %p130, %p131
      %p133 = scmp.ne.s32.totalorder %s122, %s125
      %p134 = scmp.eq.s32.totalorder %s28, 1
      %p135 = por %p133, %p134
      %p136 = scmp.ne.s32.totalorder %s125, %s126
      %p137 = scmp.eq.s32.totalorder %s28, 0
      %p138 = por %p136, %p137
      %p139 = scmp.ne.s32.totalorder %s125, %s126
      %p140 = scmp.eq.s32.totalorder %s29, 1
      %p141 = por %p139, %p140
      %p143 = scmp.ne.s32.totalorder %s126, %s142
      %p144 = scmp.eq.s32.totalorder %s29, 0
      %p145 = por %p143, %p144
      %p146 = scmp.le.s32.totalorder 1, %s23
      %p147 = scmp.lt.s32.totalorder %s23, 3
      %p148 = pnand %p146, %p147
      %p149 = pneg %p148
      // Predicated region
      $region9: #{tpu_custom_call.1} parent=5 // pred_check
        _
      $region10: #{tpu_custom_call.1} parent=5 // pred_check_branch
        %151 = sbr.rel (%p148) target = $region12
      $region11: #{tpu_custom_call.1} parent=5 // pred_region
        %s152 = ssub.s32 %s23, 1
        // Predicated region
        $region13: #{tpu_custom_call.1} parent=11 // pred_check
          %p153 = pneg %p70
        $region14: #{tpu_custom_call.1} parent=11 // pred_check_branch
          %155 = sbr.rel (%p153) target = $region16
        $region15: #{tpu_custom_call.1} parent=11 // pred_region
          _
        $region16: #{tpu_custom_call.1} parent=11 // pred_fallthru
          _
        // Predicated region
        $region17: #{tpu_custom_call.1} parent=11 // pred_check
          %p156 = pneg %p91
        $region18: #{tpu_custom_call.1} parent=11 // pred_check_branch
          %158 = sbr.rel (%p156) target = $region20
        $region19: #{tpu_custom_call.1} parent=11 // pred_region
          _
        $region20: #{tpu_custom_call.1} parent=11 // pred_fallthru
          _
        // Predicated region
        $region21: #{tpu_custom_call.1} parent=11 // pred_check
          %p159 = pneg %p112
        $region22: #{tpu_custom_call.1} parent=11 // pred_check_branch
          %161 = sbr.rel (%p159) target = $region24
        $region23: #{tpu_custom_call.1} parent=11 // pred_region
          _
        $region24: #{tpu_custom_call.1} parent=11 // pred_fallthru
          _
      $region12: #{tpu_custom_call.1} parent=5 // pred_fallthru
        _
      %p162 = scmp.lt.s32.totalorder %s23, 2
      // Predicated region
      $region25: #{tpu_custom_call.1} parent=5 // pred_check
        %p163 = pneg %p162
      $region26: #{tpu_custom_call.1} parent=5 // pred_check_branch
        %165 = sbr.rel (%p163) target = $region28
      $region27: #{tpu_custom_call.1} parent=5 // pred_region
        // Predicated region
        $region29: #{tpu_custom_call.1} parent=27 // pred_check
          %p166 = pneg %p43
        $region30: #{tpu_custom_call.1} parent=27 // pred_check_branch
          %168 = sbr.rel (%p166) target = $region32
        $region31: #{tpu_custom_call.1} parent=27 // pred_region
          %p169 = scmp.lt.s32.totalorder %s23, 1
          %s170 = scalar_select %p169, %s23, 1
          %s171 = smul.addr %s170, 8
          %s172 = scalar_lea.vmem %s1, %s171
        $region32: #{tpu_custom_call.1} parent=27 // pred_fallthru
          _
      $region28: #{tpu_custom_call.1} parent=5 // pred_fallthru
        _
      %p173 = scmp.le.s32.totalorder 1, %s23
      %p174 = scmp.lt.s32.totalorder %s23, 3
      %p175 = pnand %p173, %p174
      %p176 = pneg %p175
      // Predicated region
      $region33: #{tpu_custom_call.1} parent=5 // pred_check
        _
      $region34: #{tpu_custom_call.1} parent=5 // pred_check_branch
        %178 = sbr.rel (%p175) target = $region36
      $region35: #{tpu_custom_call.1} parent=5 // pred_region
        %s179 = ssub.s32 %s23, 1
        %p180 = scmp.lt.s32.totalorder %s28, 1
        %s181 = scalar_select %p180, %s28, 1
        %s182 = smul.addr %s181, 8
        %s183 = scalar_lea.vmem %s1, %s182
        %p184 = pneg %p49
        %p185 = pneg %p46
        %p186 = pneg %p70
        %p187 = pneg %p67
        %p188 = pneg %p91
        %p189 = pneg %p88
        %p190 = pneg %p112
        %p191 = pneg %p109
        %p192 = pneg %p138
        %p193 = pneg %p135
        %s194 = sand.u32 %s125, 1
        %s195 = scalar_lea.sflag [#allocation7], %s194
        %s196 = sand.u32 %s125, 1
        %s197 = smul.addr %s196, 8
        %s198 = scalar_lea.vmem [#allocation6], %s197
        %p199 = scmp.lt.s32.totalorder %s28, 1
        %s200 = scalar_select %p199, %s28, 1
        %s201 = smul.addr %s200, 8
        %s202 = scalar_lea.vmem %s1, %s201
        %s203 = smul.u32 %s28, 8
        %s204 = sld [smem:[#allocation5 + %s203]]
        %s205 = scalar_lea.vmem %s2, %s204
        // Predicated region
        $region37: #{tpu_custom_call.1} parent=35 // pred_check
          _
        $region38: #{tpu_custom_call.1} parent=35 // pred_check_branch
          %207 = sbr.rel target = $region40
        $region39: #{tpu_custom_call.1} parent=35 // pred_region
          // Predicated region
          $region52: #{tpu_custom_call.1} parent=39 // pred_check
            _
          $region53: #{tpu_custom_call.1} parent=39 // pred_check_branch
            %223 = sbr.rel (0) target = $region55
          $region54: #{tpu_custom_call.1} parent=39 // pred_region
            %s225 = ssub.s32 2, 1
            loop: start=0, step=1, limit=1
            $region56: #{tpu_custom_call.1} parent=54 // loop_pre_header
              _
            $region57: #{tpu_custom_call.1} parent=54 // loop_header
              %s227 = sphi 0, %s231
              %p228 = scmp.ge.s32.totalorder %s227, 1
              %s232 = sphi %s205, %s205
              %s233 = sphi [#allocation2], [#allocation2]
            $region58: #{tpu_custom_call.1} parent=54 // loop_header_branch
              %230 = sbr.rel (%p228) target = $region62
            $region59: #{tpu_custom_call.1} parent=54 // loop_body
              %v234 = vld [vmem:[%s232] sm:%s225]
              %235 = vst [vmem:[%s233] sm:%s225] %v234
            $region60: #{tpu_custom_call.1} parent=54 // loop_footer
              %s231 = sadd.s32 1, %s227
            $region61: #{tpu_custom_call.1} parent=54 // loop_footer_branch
              %226 = sbr.rel target = $region57
            $region62: #{tpu_custom_call.1} parent=54 // loop_exit
              _
          $region55: #{tpu_custom_call.1} parent=39 // pred_fallthru
            _
        $region40: #{tpu_custom_call.1} parent=35 // pred_fallthru
          _
        // Predicated region
        $region41: #{tpu_custom_call.1} parent=35 // pred_check
          _
        $region42: #{tpu_custom_call.1} parent=35 // pred_check_branch
          %209 = sbr.rel (0) target = $region44
        $region43: #{tpu_custom_call.1} parent=35 // pred_region
          %s211 = ssub.s32 2, 1
          loop: start=0, step=1, limit=1
          $region45: #{tpu_custom_call.1} parent=43 // loop_pre_header
            _
          $region46: #{tpu_custom_call.1} parent=43 // loop_header
            %s213 = sphi 0, %s217
            %p214 = scmp.ge.s32.totalorder %s213, 1
            %s218 = sphi %s205, %s205
            %s219 = sphi [#allocation2], [#allocation2]
          $region47: #{tpu_custom_call.1} parent=43 // loop_header_branch
            %216 = sbr.rel (%p214) target = $region51
          $region48: #{tpu_custom_call.1} parent=43 // loop_body
            %v220 = vld [vmem:[%s218] sm:%s211]
            %221 = vst [vmem:[%s219] sm:%s211] %v220
          $region49: #{tpu_custom_call.1} parent=43 // loop_footer
            %s217 = sadd.s32 1, %s213
          $region50: #{tpu_custom_call.1} parent=43 // loop_footer_branch
            %212 = sbr.rel target = $region46
          $region51: #{tpu_custom_call.1} parent=43 // loop_exit
            _
        $region44: #{tpu_custom_call.1} parent=35 // pred_fallthru
          _
        // Predicated region
        $region63: #{tpu_custom_call.1} parent=35 // pred_check
          _
        $region64: #{tpu_custom_call.1} parent=35 // pred_check_branch
          %238 = sbr.rel (0) target = $region66
        $region65: #{tpu_custom_call.1} parent=35 // pred_region
          %239 = vsyncadd [#allocation3], 16
        $region66: #{tpu_custom_call.1} parent=35 // pred_fallthru
          _
        %s240 = sadd.s32 %s203, 1
        %s241 = sld [smem:[#allocation5 + %s240]]
        %s242 = scalar_lea.vmem %s2, %s241
        %s243 = scalar_lea.vmem [#allocation2], 1
        %s244 = scalar_lea.sflag [#allocation3], 1
        // Predicated region
        $region67: #{tpu_custom_call.1} parent=35 // pred_check
          _
        $region68: #{tpu_custom_call.1} parent=35 // pred_check_branch
          %246 = sbr.rel target = $region70
        $region69: #{tpu_custom_call.1} parent=35 // pred_region
          // Predicated region
          $region82: #{tpu_custom_call.1} parent=69 // pred_check
            _
          $region83: #{tpu_custom_call.1} parent=69 // pred_check_branch
            %262 = sbr.rel (0) target = $region85
          $region84: #{tpu_custom_call.1} parent=69 // pred_region
            %s264 = ssub.s32 2, 1
            loop: start=0, step=1, limit=1
            $region86: #{tpu_custom_call.1} parent=84 // loop_pre_header
              _
            $region87: #{tpu_custom_call.1} parent=84 // loop_header
              %s266 = sphi 0, %s270
              %p267 = scmp.ge.s32.totalorder %s266, 1
              %s271 = sphi %s242, %s242
              %s272 = sphi %s243, %s243
            $region88: #{tpu_custom_call.1} parent=84 // loop_header_branch
              %269 = sbr.rel (%p267) target = $region92
            $region89: #{tpu_custom_call.1} parent=84 // loop_body
              %v273 = vld [vmem:[%s271] sm:%s264]
              %274 = vst [vmem:[%s272] sm:%s264] %v273
            $region90: #{tpu_custom_call.1} parent=84 // loop_footer
              %s270 = sadd.s32 1, %s266
            $region91: #{tpu_custom_call.1} parent=84 // loop_footer_branch
              %265 = sbr.rel target = $region87
            $region92: #{tpu_custom_call.1} parent=84 // loop_exit
              _
          $region85: #{tpu_custom_call.1} parent=69 // pred_fallthru
            _
        $region70: #{tpu_custom_call.1} parent=35 // pred_fallthru
          _
        // Predicated region
        $region71: #{tpu_custom_call.1} parent=35 // pred_check
          _
        $region72: #{tpu_custom_call.1} parent=35 // pred_check_branch
          %248 = sbr.rel (0) target = $region74
        $region73: #{tpu_custom_call.1} parent=35 // pred_region
          %s250 = ssub.s32 2, 1
          loop: start=0, step=1, limit=1
          $region75: #{tpu_custom_call.1} parent=73 // loop_pre_header
            _
          $region76: #{tpu_custom_call.1} parent=73 // loop_header
            %s252 = sphi 0, %s256
            %p253 = scmp.ge.s32.totalorder %s252, 1
            %s257 = sphi %s242, %s242
            %s258 = sphi %s243, %s243
          $region77: #{tpu_custom_call.1} parent=73 // loop_header_branch
            %255 = sbr.rel (%p253) target = $region81
          $region78: #{tpu_custom_call.1} parent=73 // loop_body
            %v259 = vld [vmem:[%s257] sm:%s250]
            %260 = vst [vmem:[%s258] sm:%s250] %v259
          $region79: #{tpu_custom_call.1} parent=73 // loop_footer
            %s256 = sadd.s32 1, %s252
          $region80: #{tpu_custom_call.1} parent=73 // loop_footer_branch
            %251 = sbr.rel target = $region76
          $region81: #{tpu_custom_call.1} parent=73 // loop_exit
            _
        $region74: #{tpu_custom_call.1} parent=35 // pred_fallthru
          _
        // Predicated region
        $region93: #{tpu_custom_call.1} parent=35 // pred_check
          _
        $region94: #{tpu_custom_call.1} parent=35 // pred_check_branch
          %277 = sbr.rel (0) target = $region96
        $region95: #{tpu_custom_call.1} parent=35 // pred_region
          %278 = vsyncadd %s244, 16
        $region96: #{tpu_custom_call.1} parent=35 // pred_fallthru
          _
        %s279 = sadd.s32 %s203, 2
        %s280 = sld [smem:[#allocation5 + %s279]]
        %s281 = scalar_lea.vmem %s2, %s280
        %s282 = scalar_lea.vmem [#allocation2], 2
        %s283 = scalar_lea.sflag [#allocation3], 2
        // Predicated region
        $region97: #{tpu_custom_call.1} parent=35 // pred_check
          _
        $region98: #{tpu_custom_call.1} parent=35 // pred_check_branch
          %285 = sbr.rel target = $region100
        $region99: #{tpu_custom_call.1} parent=35 // pred_region
          // Predicated region
          $region112: #{tpu_custom_call.1} parent=99 // pred_check
            _
          $region113: #{tpu_custom_call.1} parent=99 // pred_check_branch
            %301 = sbr.rel (0) target = $region115
          $region114: #{tpu_custom_call.1} parent=99 // pred_region
            %s303 = ssub.s32 2, 1
            loop: start=0, step=1, limit=1
            $region116: #{tpu_custom_call.1} parent=114 // loop_pre_header
              _
            $region117: #{tpu_custom_call.1} parent=114 // loop_header
              %s305 = sphi 0, %s309
              %p306 = scmp.ge.s32.totalorder %s305, 1
              %s310 = sphi %s281, %s281
              %s311 = sphi %s282, %s282
            $region118: #{tpu_custom_call.1} parent=114 // loop_header_branch
              %308 = sbr.rel (%p306) target = $region122
            $region119: #{tpu_custom_call.1} parent=114 // loop_body
              %v312 = vld [vmem:[%s310] sm:%s303]
              %313 = vst [vmem:[%s311] sm:%s303] %v312
            $region120: #{tpu_custom_call.1} parent=114 // loop_footer
              %s309 = sadd.s32 1, %s305
            $region121: #{tpu_custom_call.1} parent=114 // loop_footer_branch
              %304 = sbr.rel target = $region117
            $region122: #{tpu_custom_call.1} parent=114 // loop_exit
              _
          $region115: #{tpu_custom_call.1} parent=99 // pred_fallthru
            _
        $region100: #{tpu_custom_call.1} parent=35 // pred_fallthru
          _
        // Predicated region
        $region101: #{tpu_custom_call.1} parent=35 // pred_check
          _
        $region102: #{tpu_custom_call.1} parent=35 // pred_check_branch
          %287 = sbr.rel (0) target = $region104
        $region103: #{tpu_custom_call.1} parent=35 // pred_region
          %s289 = ssub.s32 2, 1
          loop: start=0, step=1, limit=1
          $region105: #{tpu_custom_call.1} parent=103 // loop_pre_header
            _
          $region106: #{tpu_custom_call.1} parent=103 // loop_header
            %s291 = sphi 0, %s295
            %p292 = scmp.ge.s32.totalorder %s291, 1
            %s296 = sphi %s281, %s281
            %s297 = sphi %s282, %s282
          $region107: #{tpu_custom_call.1} parent=103 // loop_header_branch
            %294 = sbr.rel (%p292) target = $region111
          $region108: #{tpu_custom_call.1} parent=103 // loop_body
            %v298 = vld [vmem:[%s296] sm:%s289]
            %299 = vst [vmem:[%s297] sm:%s289] %v298
          $region109: #{tpu_custom_call.1} parent=103 // loop_footer
            %s295 = sadd.s32 1, %s291
          $region110: #{tpu_custom_call.1} parent=103 // loop_footer_branch
            %290 = sbr.rel target = $region106
          $region111: #{tpu_custom_call.1} parent=103 // loop_exit
            _
        $region104: #{tpu_custom_call.1} parent=35 // pred_fallthru
          _
        // Predicated region
        $region123: #{tpu_custom_call.1} parent=35 // pred_check
          _
        $region124: #{tpu_custom_call.1} parent=35 // pred_check_branch
          %316 = sbr.rel (0) target = $region126
        $region125: #{tpu_custom_call.1} parent=35 // pred_region
          %317 = vsyncadd %s283, 16
        $region126: #{tpu_custom_call.1} parent=35 // pred_fallthru
          _
        %s318 = sadd.s32 %s203, 3
        %s319 = sld [smem:[#allocation5 + %s318]]
        %s320 = scalar_lea.vmem %s2, %s319
        %s321 = scalar_lea.vmem [#allocation2], 3
        %s322 = scalar_lea.sflag [#allocation3], 3
        // Predicated region
        $region127: #{tpu_custom_call.1} parent=35 // pred_check
          _
        $region128: #{tpu_custom_call.1} parent=35 // pred_check_branch
          %324 = sbr.rel target = $region130
        $region129: #{tpu_custom_call.1} parent=35 // pred_region
          // Predicated region
          $region142: #{tpu_custom_call.1} parent=129 // pred_check
            _
          $region143: #{tpu_custom_call.1} parent=129 // pred_check_branch
            %340 = sbr.rel (0) target = $region145
          $region144: #{tpu_custom_call.1} parent=129 // pred_region
            %s342 = ssub.s32 2, 1
            loop: start=0, step=1, limit=1
            $region146: #{tpu_custom_call.1} parent=144 // loop_pre_header
              _
            $region147: #{tpu_custom_call.1} parent=144 // loop_header
              %s344 = sphi 0, %s348
              %p345 = scmp.ge.s32.totalorder %s344, 1
              %s349 = sphi %s320, %s320
              %s350 = sphi %s321, %s321
            $region148: #{tpu_custom_call.1} parent=144 // loop_header_branch
              %347 = sbr.rel (%p345) target = $region152
            $region149: #{tpu_custom_call.1} parent=144 // loop_body
              %v351 = vld [vmem:[%s349] sm:%s342]
              %352 = vst [vmem:[%s350] sm:%s342] %v351
            $region150: #{tpu_custom_call.1} parent=144 // loop_footer
              %s348 = sadd.s32 1, %s344
            $region151: #{tpu_custom_call.1} parent=144 // loop_footer_branch
              %343 = sbr.rel target = $region147
            $region152: #{tpu_custom_call.1} parent=144 // loop_exit
              _
          $region145: #{tpu_custom_call.1} parent=129 // pred_fallthru
            _
        $region130: #{tpu_custom_call.1} parent=35 // pred_fallthru
          _
        // Predicated region
        $region131: #{tpu_custom_call.1} parent=35 // pred_check
          _
        $region132: #{tpu_custom_call.1} parent=35 // pred_check_branch
          %326 = sbr.rel (0) target = $region134
        $region133: #{tpu_custom_call.1} parent=35 // pred_region
          %s328 = ssub.s32 2, 1
          loop: start=0, step=1, limit=1
          $region135: #{tpu_custom_call.1} parent=133 // loop_pre_header
            _
          $region136: #{tpu_custom_call.1} parent=133 // loop_header
            %s330 = sphi 0, %s334
            %p331 = scmp.ge.s32.totalorder %s330, 1
            %s335 = sphi %s320, %s320
            %s336 = sphi %s321, %s321
          $region137: #{tpu_custom_call.1} parent=133 // loop_header_branch
            %333 = sbr.rel (%p331) target = $region141
          $region138: #{tpu_custom_call.1} parent=133 // loop_body
            %v337 = vld [vmem:[%s335] sm:%s328]
            %338 = vst [vmem:[%s336] sm:%s328] %v337
          $region139: #{tpu_custom_call.1} parent=133 // loop_footer
            %s334 = sadd.s32 1, %s330
          $region140: #{tpu_custom_call.1} parent=133 // loop_footer_branch
            %329 = sbr.rel target = $region136
          $region141: #{tpu_custom_call.1} parent=133 // loop_exit
            _
        $region134: #{tpu_custom_call.1} parent=35 // pred_fallthru
          _
        // Predicated region
        $region153: #{tpu_custom_call.1} parent=35 // pred_check
          _
        $region154: #{tpu_custom_call.1} parent=35 // pred_check_branch
          %355 = sbr.rel (0) target = $region156
        $region155: #{tpu_custom_call.1} parent=35 // pred_region
          %356 = vsyncadd %s322, 16
        $region156: #{tpu_custom_call.1} parent=35 // pred_fallthru
          _
        %s357 = sadd.s32 %s203, 4
        %s358 = sld [smem:[#allocation5 + %s357]]
        %s359 = scalar_lea.vmem %s2, %s358
        %s360 = scalar_lea.vmem [#allocation2], 4
        %s361 = scalar_lea.sflag [#allocation3], 4
        // Predicated region
        $region157: #{tpu_custom_call.1} parent=35 // pred_check
          _
        $region158: #{tpu_custom_call.1} parent=35 // pred_check_branch
          %363 = sbr.rel target = $region160
        $region159: #{tpu_custom_call.1} parent=35 // pred_region
          // Predicated region
          $region172: #{tpu_custom_call.1} parent=159 // pred_check
            _
          $region173: #{tpu_custom_call.1} parent=159 // pred_check_branch
            %379 = sbr.rel (0) target = $region175
          $region174: #{tpu_custom_call.1} parent=159 // pred_region
            %s381 = ssub.s32 2, 1
            loop: start=0, step=1, limit=1
            $region176: #{tpu_custom_call.1} parent=174 // loop_pre_header
              _
            $region177: #{tpu_custom_call.1} parent=174 // loop_header
              %s383 = sphi 0, %s387
              %p384 = scmp.ge.s32.totalorder %s383, 1
              %s388 = sphi %s359, %s359
              %s389 = sphi %s360, %s360
            $region178: #{tpu_custom_call.1} parent=174 // loop_header_branch
              %386 = sbr.rel (%p384) target = $region182
            $region179: #{tpu_custom_call.1} parent=174 // loop_body
              %v390 = vld [vmem:[%s388] sm:%s381]
              %391 = vst [vmem:[%s389] sm:%s381] %v390
            $region180: #{tpu_custom_call.1} parent=174 // loop_footer
              %s387 = sadd.s32 1, %s383
            $region181: #{tpu_custom_call.1} parent=174 // loop_footer_branch
              %382 = sbr.rel target = $region177
            $region182: #{tpu_custom_call.1} parent=174 // loop_exit
              _
          $region175: #{tpu_custom_call.1} parent=159 // pred_fallthru
            _
        $region160: #{tpu_custom_call.1} parent=35 // pred_fallthru
          _
        // Predicated region
        $region161: #{tpu_custom_call.1} parent=35 // pred_check
          _
        $region162: #{tpu_custom_call.1} parent=35 // pred_check_branch
          %365 = sbr.rel (0) target = $region164
        $region163: #{tpu_custom_call.1} parent=35 // pred_region
          %s367 = ssub.s32 2, 1
          loop: start=0, step=1, limit=1
          $region165: #{tpu_custom_call.1} parent=163 // loop_pre_header
            _
          $region166: #{tpu_custom_call.1} parent=163 // loop_header
            %s369 = sphi 0, %s373
            %p370 = scmp.ge.s32.totalorder %s369, 1
            %s374 = sphi %s359, %s359
            %s375 = sphi %s360, %s360
          $region167: #{tpu_custom_call.1} parent=163 // loop_header_branch
            %372 = sbr.rel (%p370) target = $region171
          $region168: #{tpu_custom_call.1} parent=163 // loop_body
            %v376 = vld [vmem:[%s374] sm:%s367]
            %377 = vst [vmem:[%s375] sm:%s367] %v376
          $region169: #{tpu_custom_call.1} parent=163 // loop_footer
            %s373 = sadd.s32 1, %s369
          $region170: #{tpu_custom_call.1} parent=163 // loop_footer_branch
            %368 = sbr.rel target = $region166
          $region171: #{tpu_custom_call.1} parent=163 // loop_exit
            _
        $region164: #{tpu_custom_call.1} parent=35 // pred_fallthru
          _
        // Predicated region
        $region183: #{tpu_custom_call.1} parent=35 // pred_check
          _
        $region184: #{tpu_custom_call.1} parent=35 // pred_check_branch
          %394 = sbr.rel (0) target = $region186
        $region185: #{tpu_custom_call.1} parent=35 // pred_region
          %395 = vsyncadd %s361, 16
        $region186: #{tpu_custom_call.1} parent=35 // pred_fallthru
          _
        %s396 = sadd.s32 %s203, 5
        %s397 = sld [smem:[#allocation5 + %s396]]
        %s398 = scalar_lea.vmem %s2, %s397
        %s399 = scalar_lea.vmem [#allocation2], 5
        %s400 = scalar_lea.sflag [#allocation3], 5
        // Predicated region
        $region187: #{tpu_custom_call.1} parent=35 // pred_check
          _
        $region188: #{tpu_custom_call.1} parent=35 // pred_check_branch
          %402 = sbr.rel target = $region190
        $region189: #{tpu_custom_call.1} parent=35 // pred_region
          // Predicated region
          $region202: #{tpu_custom_call.1} parent=189 // pred_check
            _
          $region203: #{tpu_custom_call.1} parent=189 // pred_check_branch
            %418 = sbr.rel (0) target = $region205
          $region204: #{tpu_custom_call.1} parent=189 // pred_region
            %s420 = ssub.s32 2, 1
            loop: start=0, step=1, limit=1
            $region206: #{tpu_custom_call.1} parent=204 // loop_pre_header
              _
            $region207: #{tpu_custom_call.1} parent=204 // loop_header
              %s422 = sphi 0, %s426
              %p423 = scmp.ge.s32.totalorder %s422, 1
              %s427 = sphi %s398, %s398
              %s428 = sphi %s399, %s399
            $region208: #{tpu_custom_call.1} parent=204 // loop_header_branch
              %425 = sbr.rel (%p423) target = $region212
            $region209: #{tpu_custom_call.1} parent=204 // loop_body
              %v429 = vld [vmem:[%s427] sm:%s420]
              %430 = vst [vmem:[%s428] sm:%s420] %v429
            $region210: #{tpu_custom_call.1} parent=204 // loop_footer
              %s426 = sadd.s32 1, %s422
            $region211: #{tpu_custom_call.1} parent=204 // loop_footer_branch
              %421 = sbr.rel target = $region207
            $region212: #{tpu_custom_call.1} parent=204 // loop_exit
              _
          $region205: #{tpu_custom_call.1} parent=189 // pred_fallthru
            _
        $region190: #{tpu_custom_call.1} parent=35 // pred_fallthru
          _
        // Predicated region
        $region191: #{tpu_custom_call.1} parent=35 // pred_check
          _
        $region192: #{tpu_custom_call.1} parent=35 // pred_check_branch
          %404 = sbr.rel (0) target = $region194
        $region193: #{tpu_custom_call.1} parent=35 // pred_region
          %s406 = ssub.s32 2, 1
          loop: start=0, step=1, limit=1
          $region195: #{tpu_custom_call.1} parent=193 // loop_pre_header
            _
          $region196: #{tpu_custom_call.1} parent=193 // loop_header
            %s408 = sphi 0, %s412
            %p409 = scmp.ge.s32.totalorder %s408, 1
            %s413 = sphi %s398, %s398
            %s414 = sphi %s399, %s399
          $region197: #{tpu_custom_call.1} parent=193 // loop_header_branch
            %411 = sbr.rel (%p409) target = $region201
          $region198: #{tpu_custom_call.1} parent=193 // loop_body
            %v415 = vld [vmem:[%s413] sm:%s406]
            %416 = vst [vmem:[%s414] sm:%s406] %v415
          $region199: #{tpu_custom_call.1} parent=193 // loop_footer
            %s412 = sadd.s32 1, %s408
          $region200: #{tpu_custom_call.1} parent=193 // loop_footer_branch
            %407 = sbr.rel target = $region196
          $region201: #{tpu_custom_call.1} parent=193 // loop_exit
            _
        $region194: #{tpu_custom_call.1} parent=35 // pred_fallthru
          _
        // Predicated region
        $region213: #{tpu_custom_call.1} parent=35 // pred_check
          _
        $region214: #{tpu_custom_call.1} parent=35 // pred_check_branch
          %433 = sbr.rel (0) target = $region216
        $region215: #{tpu_custom_call.1} parent=35 // pred_region
          %434 = vsyncadd %s400, 16
        $region216: #{tpu_custom_call.1} parent=35 // pred_fallthru
          _
        %s435 = sadd.s32 %s203, 6
        %s436 = sld [smem:[#allocation5 + %s435]]
        %s437 = scalar_lea.vmem %s2, %s436
        %s438 = scalar_lea.vmem [#allocation2], 6
        %s439 = scalar_lea.sflag [#allocation3], 6
        // Predicated region
        $region217: #{tpu_custom_call.1} parent=35 // pred_check
          _
        $region218: #{tpu_custom_call.1} parent=35 // pred_check_branch
          %441 = sbr.rel target = $region220
        $region219: #{tpu_custom_call.1} parent=35 // pred_region
          // Predicated region
          $region232: #{tpu_custom_call.1} parent=219 // pred_check
            _
          $region233: #{tpu_custom_call.1} parent=219 // pred_check_branch
            %457 = sbr.rel (0) target = $region235
          $region234: #{tpu_custom_call.1} parent=219 // pred_region
            %s459 = ssub.s32 2, 1
            loop: start=0, step=1, limit=1
            $region236: #{tpu_custom_call.1} parent=234 // loop_pre_header
              _
            $region237: #{tpu_custom_call.1} parent=234 // loop_header
              %s461 = sphi 0, %s465
              %p462 = scmp.ge.s32.totalorder %s461, 1
              %s466 = sphi %s437, %s437
              %s467 = sphi %s438, %s438
            $region238: #{tpu_custom_call.1} parent=234 // loop_header_branch
              %464 = sbr.rel (%p462) target = $region242
            $region239: #{tpu_custom_call.1} parent=234 // loop_body
              %v468 = vld [vmem:[%s466] sm:%s459]
              %469 = vst [vmem:[%s467] sm:%s459] %v468
            $region240: #{tpu_custom_call.1} parent=234 // loop_footer
              %s465 = sadd.s32 1, %s461
            $region241: #{tpu_custom_call.1} parent=234 // loop_footer_branch
              %460 = sbr.rel target = $region237
            $region242: #{tpu_custom_call.1} parent=234 // loop_exit
              _
          $region235: #{tpu_custom_call.1} parent=219 // pred_fallthru
            _
        $region220: #{tpu_custom_call.1} parent=35 // pred_fallthru
          _
        // Predicated region
        $region221: #{tpu_custom_call.1} parent=35 // pred_check
          _
        $region222: #{tpu_custom_call.1} parent=35 // pred_check_branch
          %443 = sbr.rel (0) target = $region224
        $region223: #{tpu_custom_call.1} parent=35 // pred_region
          %s445 = ssub.s32 2, 1
          loop: start=0, step=1, limit=1
          $region225: #{tpu_custom_call.1} parent=223 // loop_pre_header
            _
          $region226: #{tpu_custom_call.1} parent=223 // loop_header
            %s447 = sphi 0, %s451
            %p448 = scmp.ge.s32.totalorder %s447, 1
            %s452 = sphi %s437, %s437
            %s453 = sphi %s438, %s438
          $region227: #{tpu_custom_call.1} parent=223 // loop_header_branch
            %450 = sbr.rel (%p448) target = $region231
          $region228: #{tpu_custom_call.1} parent=223 // loop_body
            %v454 = vld [vmem:[%s452] sm:%s445]
            %455 = vst [vmem:[%s453] sm:%s445] %v454
          $region229: #{tpu_custom_call.1} parent=223 // loop_footer
            %s451 = sadd.s32 1, %s447
          $region230: #{tpu_custom_call.1} parent=223 // loop_footer_branch
            %446 = sbr.rel target = $region226
          $region231: #{tpu_custom_call.1} parent=223 // loop_exit
            _
        $region224: #{tpu_custom_call.1} parent=35 // pred_fallthru
          _
        // Predicated region
        $region243: #{tpu_custom_call.1} parent=35 // pred_check
          _
        $region244: #{tpu_custom_call.1} parent=35 // pred_check_branch
          %472 = sbr.rel (0) target = $region246
        $region245: #{tpu_custom_call.1} parent=35 // pred_region
          %473 = vsyncadd %s439, 16
        $region246: #{tpu_custom_call.1} parent=35 // pred_fallthru
          _
        %s474 = sadd.s32 %s203, 7
        %s475 = sld [smem:[#allocation5 + %s474]]
        %s476 = scalar_lea.vmem %s2, %s475
        %s477 = scalar_lea.vmem [#allocation2], 7
        %s478 = scalar_lea.sflag [#allocation3], 7
        // Predicated region
        $region247: #{tpu_custom_call.1} parent=35 // pred_check
          _
        $region248: #{tpu_custom_call.1} parent=35 // pred_check_branch
          %480 = sbr.rel target = $region250
        $region249: #{tpu_custom_call.1} parent=35 // pred_region
          // Predicated region
          $region262: #{tpu_custom_call.1} parent=249 // pred_check
            _
          $region263: #{tpu_custom_call.1} parent=249 // pred_check_branch
            %496 = sbr.rel (0) target = $region265
          $region264: #{tpu_custom_call.1} parent=249 // pred_region
            %s498 = ssub.s32 2, 1
            loop: start=0, step=1, limit=1
            $region266: #{tpu_custom_call.1} parent=264 // loop_pre_header
              _
            $region267: #{tpu_custom_call.1} parent=264 // loop_header
              %s500 = sphi 0, %s504
              %p501 = scmp.ge.s32.totalorder %s500, 1
              %s505 = sphi %s476, %s476
              %s506 = sphi %s477, %s477
            $region268: #{tpu_custom_call.1} parent=264 // loop_header_branch
              %503 = sbr.rel (%p501) target = $region272
            $region269: #{tpu_custom_call.1} parent=264 // loop_body
              %v507 = vld [vmem:[%s505] sm:%s498]
              %508 = vst [vmem:[%s506] sm:%s498] %v507
            $region270: #{tpu_custom_call.1} parent=264 // loop_footer
              %s504 = sadd.s32 1, %s500
            $region271: #{tpu_custom_call.1} parent=264 // loop_footer_branch
              %499 = sbr.rel target = $region267
            $region272: #{tpu_custom_call.1} parent=264 // loop_exit
              _
          $region265: #{tpu_custom_call.1} parent=249 // pred_fallthru
            _
        $region250: #{tpu_custom_call.1} parent=35 // pred_fallthru
          _
        // Predicated region
        $region251: #{tpu_custom_call.1} parent=35 // pred_check
          _
        $region252: #{tpu_custom_call.1} parent=35 // pred_check_branch
          %482 = sbr.rel (0) target = $region254
        $region253: #{tpu_custom_call.1} parent=35 // pred_region
          %s484 = ssub.s32 2, 1
          loop: start=0, step=1, limit=1
          $region255: #{tpu_custom_call.1} parent=253 // loop_pre_header
            _
          $region256: #{tpu_custom_call.1} parent=253 // loop_header
            %s486 = sphi 0, %s490
            %p487 = scmp.ge.s32.totalorder %s486, 1
            %s491 = sphi %s476, %s476
            %s492 = sphi %s477, %s477
          $region257: #{tpu_custom_call.1} parent=253 // loop_header_branch
            %489 = sbr.rel (%p487) target = $region261
          $region258: #{tpu_custom_call.1} parent=253 // loop_body
            %v493 = vld [vmem:[%s491] sm:%s484]
            %494 = vst [vmem:[%s492] sm:%s484] %v493
          $region259: #{tpu_custom_call.1} parent=253 // loop_footer
            %s490 = sadd.s32 1, %s486
          $region260: #{tpu_custom_call.1} parent=253 // loop_footer_branch
            %485 = sbr.rel target = $region256
          $region261: #{tpu_custom_call.1} parent=253 // loop_exit
            _
        $region254: #{tpu_custom_call.1} parent=35 // pred_fallthru
          _
        // Predicated region
        $region273: #{tpu_custom_call.1} parent=35 // pred_check
          _
        $region274: #{tpu_custom_call.1} parent=35 // pred_check_branch
          %511 = sbr.rel (0) target = $region276
        $region275: #{tpu_custom_call.1} parent=35 // pred_region
          %512 = vsyncadd %s478, 16
        $region276: #{tpu_custom_call.1} parent=35 // pred_fallthru
          _
        %v513 = vld [vmem:[%s202] sm:$0xff]
        %v514 = vlaneseq
        %v515 = vand.u32 %v514, 127
        %v516 = vadd.s32 %v515, 128
        %v517 = vadd.s32 %v515, 256
        %518 = vset.pattern.permute.xlu0 0
        %519 = vperm.xlu0 %518, %v513
        %v520 = vpop.permute.xlu0 %519
        %vm521 = vcmp.eq.s32.totalorder %v515, %v520
        %vm522 = vcmp.eq.s32.totalorder %v516, %v520
        %vm523 = vcmp.eq.s32.totalorder %v517, %v520
        %v524 = vsel %vm521, 1, 0
        %v525 = vsel %vm522, 1, 0
        %v526 = vsel %vm523, 1, 0
        %527 = vset.pattern.permute.xlu0 1
        %528 = vperm.xlu0 %527, %v513
        %v529 = vpop.permute.xlu0 %528
        %vm530 = vcmp.eq.s32.totalorder %v515, %v529
        %vm531 = vcmp.eq.s32.totalorder %v516, %v529
        %vm532 = vcmp.eq.s32.totalorder %v517, %v529
        %v533 = vsel %vm530, 1, 0
        %v534 = vsel %vm531, 1, 0
        %v535 = vsel %vm532, 1, 0
        %v536 = vadd.s32 %v524, %v533
        %v537 = vadd.s32 %v525, %v534
        %v538 = vadd.s32 %v526, %v535
        %539 = vset.pattern.permute.xlu0 2
        %540 = vperm.xlu0 %539, %v513
        %v541 = vpop.permute.xlu0 %540
        %vm542 = vcmp.eq.s32.totalorder %v515, %v541
        %vm543 = vcmp.eq.s32.totalorder %v516, %v541
        %vm544 = vcmp.eq.s32.totalorder %v517, %v541
        %v545 = vsel %vm542, 1, 0
        %v546 = vsel %vm543, 1, 0
        %v547 = vsel %vm544, 1, 0
        %v548 = vadd.s32 %v536, %v545
        %v549 = vadd.s32 %v537, %v546
        %v550 = vadd.s32 %v538, %v547
        %551 = vset.pattern.permute.xlu0 3
        %552 = vperm.xlu0 %551, %v513
        %v553 = vpop.permute.xlu0 %552
        %vm554 = vcmp.eq.s32.totalorder %v515, %v553
        %vm555 = vcmp.eq.s32.totalorder %v516, %v553
        %vm556 = vcmp.eq.s32.totalorder %v517, %v553
        %v557 = vsel %vm554, 1, 0
        %v558 = vsel %vm555, 1, 0
        %v559 = vsel %vm556, 1, 0
        %v560 = vadd.s32 %v548, %v557
        %v561 = vadd.s32 %v549, %v558
        %v562 = vadd.s32 %v550, %v559
        %563 = vset.pattern.permute.xlu0 4
        %564 = vperm.xlu0 %563, %v513
        %v565 = vpop.permute.xlu0 %564
        %vm566 = vcmp.eq.s32.totalorder %v515, %v565
        %vm567 = vcmp.eq.s32.totalorder %v516, %v565
        %vm568 = vcmp.eq.s32.totalorder %v517, %v565
        %v569 = vsel %vm566, 1, 0
        %v570 = vsel %vm567, 1, 0
        %v571 = vsel %vm568, 1, 0
        %v572 = vadd.s32 %v560, %v569
        %v573 = vadd.s32 %v561, %v570
        %v574 = vadd.s32 %v562, %v571
        %575 = vset.pattern.permute.xlu0 5
        %576 = vperm.xlu0 %575, %v513
        %v577 = vpop.permute.xlu0 %576
        %vm578 = vcmp.eq.s32.totalorder %v515, %v577
        %vm579 = vcmp.eq.s32.totalorder %v516, %v577
        %vm580 = vcmp.eq.s32.totalorder %v517, %v577
        %v581 = vsel %vm578, 1, 0
        %v582 = vsel %vm579, 1, 0
        %v583 = vsel %vm580, 1, 0
        %v584 = vadd.s32 %v572, %v581
        %v585 = vadd.s32 %v573, %v582
        %v586 = vadd.s32 %v574, %v583
        %587 = vset.pattern.permute.xlu0 6
        %588 = vperm.xlu0 %587, %v513
        %v589 = vpop.permute.xlu0 %588
        %vm590 = vcmp.eq.s32.totalorder %v515, %v589
        %vm591 = vcmp.eq.s32.totalorder %v516, %v589
        %vm592 = vcmp.eq.s32.totalorder %v517, %v589
        %v593 = vsel %vm590, 1, 0
        %v594 = vsel %vm591, 1, 0
        %v595 = vsel %vm592, 1, 0
        %v596 = vadd.s32 %v584, %v593
        %v597 = vadd.s32 %v585, %v594
        %v598 = vadd.s32 %v586, %v595
        %599 = vset.pattern.permute.xlu0 7
        %600 = vperm.xlu0 %599, %v513
        %v601 = vpop.permute.xlu0 %600
        %vm602 = vcmp.eq.s32.totalorder %v515, %v601
        %vm603 = vcmp.eq.s32.totalorder %v516, %v601
        %vm604 = vcmp.eq.s32.totalorder %v517, %v601
        %v605 = vsel %vm602, 1, 0
        %v606 = vsel %vm603, 1, 0
        %v607 = vsel %vm604, 1, 0
        %v608 = vadd.s32 %v596, %v605
        %v609 = vadd.s32 %v597, %v606
        %v610 = vadd.s32 %v598, %v607
        %v611 = vcvt.s32.f32 %v608
        %v612 = vcvt.s32.f32 %v609
        %v613 = vcvt.s32.f32 %v610
        %v614 = vld [vmem:[%s3] sm:$0xff]
        %v615 = vld [vmem:[%s3 + $0x8] sm:$0xff]
        %v616 = vld [vmem:[%s3 + $0x10] sm:$0xff]
        %v617 = vld [vmem:[%s3 + $0x18] sm:$0xff]
        %v618 = vld [vmem:[%s3 + $0x20] sm:$0xff]
        %v619 = vld [vmem:[%s3 + $0x28] sm:$0xff]
        %v620 = vld [vmem:[%s3 + $0x30] sm:$0xff]
        %v621 = vld [vmem:[%s3 + $0x38] sm:$0xff]
        %v622 = vld [vmem:[%s3 + $0x40] sm:$0xff]
        %v623 = vld [vmem:[%s3 + $0x48] sm:$0xff]
        %v624 = vld [vmem:[%s3 + $0x50] sm:$0xff]
        %v625 = vld [vmem:[%s3 + $0x58] sm:$0xff]
        %v626 = vld [vmem:[%s3 + $0x60] sm:$0xff]
        %v627 = vld [vmem:[%s3 + $0x68] sm:$0xff]
        %v628 = vld [vmem:[%s3 + $0x70] sm:$0xff]
        %v629 = vld [vmem:[%s3 + $0x78] sm:$0xff]
        %v630 = vld [vmem:[%s3 + $0x80] sm:$0xff]
        %v631 = vld [vmem:[%s3 + $0x88] sm:$0xff]
        %v632 = vld [vmem:[%s3 + $0x90] sm:$0xff]
        %v633 = vld [vmem:[%s3 + $0x98] sm:$0xff]
        %v634 = vld [vmem:[%s3 + $0xa0] sm:$0xff]
        %v635 = vld [vmem:[%s3 + $0xa8] sm:$0xff]
        %v636 = vld [vmem:[%s3 + $0xb0] sm:$0xff]
        %v637 = vld [vmem:[%s3 + $0xb8] sm:$0xff]
        %v638 = vld [vmem:[%s3 + $0xc0] sm:$0xff]
        %v639 = vld [vmem:[%s3 + $0xc8] sm:$0xff]
        %v640 = vld [vmem:[%s3 + $0xd0] sm:$0xff]
        %v641 = vld [vmem:[%s3 + $0xd8] sm:$0xff]
        %v642 = vld [vmem:[%s3 + $0xe0] sm:$0xff]
        %v643 = vld [vmem:[%s3 + $0xe8] sm:$0xff]
        %v644 = vld [vmem:[%s3 + $0xf0] sm:$0xff]
        %v645 = vld [vmem:[%s3 + $0xf8] sm:$0xff]
        %v646 = vld [vmem:[%s3 + $0x100] sm:$0xff]
        %v647 = vld [vmem:[%s3 + $0x108] sm:$0xff]
        %v648 = vld [vmem:[%s3 + $0x110] sm:$0xff]
        %v649 = vld [vmem:[%s3 + $0x118] sm:$0xff]
        %v650 = vld [vmem:[%s3 + $0x120] sm:$0x3]
        loop: start=0, step=1, limit=8
        $region277: #{tpu_custom_call.1} parent=35 // loop_pre_header
          _
        $region278: #{tpu_custom_call.1} parent=35 // loop_header
          %s652 = sphi 0, %s656
          %p653 = scmp.ge.s32.totalorder %s652, 8
        $region279: #{tpu_custom_call.1} parent=35 // loop_header_branch
          %655 = sbr.rel (%p653) target = $region283
        $region280: #{tpu_custom_call.1} parent=35 // loop_body
          %p657 = scmp.lt.s32.totalorder %s652, 0
          %s658 = ssub.s32 0, %s652
          %s659 = scalar_select %p657, %s658, %s652
          %s660 = sand.u32 %s659, 7
          %s661 = ssub.s32 0, %s660
          %s662 = scalar_select %p657, %s661, %s660
          %p663 = scmp.ne.s32.totalorder %s662, 0
          %p664 = scmp.lt.s32.totalorder %s662, 0
          %p665 = pnand %p664, %p663
          %p666 = pneg %p665
          %s667 = sadd.s32 %s662, 8
          %s668 = scalar_select %p666, %s667, %s662
          %s669 = scalar_lea.sflag [#allocation3], %s668
          %s670 = smul.u32 1, 1
          %s671 = sshll.u32 %s670, 4
          %672 = dma.done %s669, %s671
          %s673 = sadd.s32 %s652, 8
          %p674 = scmp.lt.s32.totalorder %s673, 8
          // Predicated region
          $region284: #{tpu_custom_call.1} parent=280 // pred_check
            %p675 = pneg %p674
          $region285: #{tpu_custom_call.1} parent=280 // pred_check_branch
            %677 = sbr.rel (%p675) target = $region287
          $region286: #{tpu_custom_call.1} parent=280 // pred_region
            %s678 = sadd.s32 %s203, %s673
            %s679 = sld [smem:[#allocation5 + %s678]]
            %p680 = scmp.lt.s32.totalorder %s673, 0
            %s681 = ssub.s32 0, %s673
            %s682 = scalar_select %p680, %s681, %s673
            %s683 = sand.u32 %s682, 7
            %s684 = ssub.s32 0, %s683
            %s685 = scalar_select %p680, %s684, %s683
            %p686 = scmp.ne.s32.totalorder %s685, 0
            %p687 = scmp.lt.s32.totalorder %s685, 0
            %p688 = pnand %p687, %p686
            %p689 = pneg %p688
            %s690 = sadd.s32 %s685, 8
            %s691 = scalar_select %p689, %s690, %s685
            %s692 = scalar_lea.vmem %s2, %s679
            %s693 = scalar_lea.vmem [#allocation2], %s673
            %s694 = scalar_lea.sflag [#allocation3], %s691
            // Predicated region
            $region288: #{tpu_custom_call.1} parent=286 // pred_check
              _
            $region289: #{tpu_custom_call.1} parent=286 // pred_check_branch
              %696 = sbr.rel target = $region291
            $region290: #{tpu_custom_call.1} parent=286 // pred_region
              // Predicated region
              $region303: #{tpu_custom_call.1} parent=290 // pred_check
                _
              $region304: #{tpu_custom_call.1} parent=290 // pred_check_branch
                %712 = sbr.rel (0) target = $region306
              $region305: #{tpu_custom_call.1} parent=290 // pred_region
                %s714 = ssub.s32 2, 1
                loop: start=0, step=1, limit=1
                $region307: #{tpu_custom_call.1} parent=305 // loop_pre_header
                  _
                $region308: #{tpu_custom_call.1} parent=305 // loop_header
                  %s716 = sphi 0, %s720
                  %p717 = scmp.ge.s32.totalorder %s716, 1
                  %s721 = sphi %s692, %s692
                  %s722 = sphi %s693, %s693
                $region309: #{tpu_custom_call.1} parent=305 // loop_header_branch
                  %719 = sbr.rel (%p717) target = $region313
                $region310: #{tpu_custom_call.1} parent=305 // loop_body
                  %v723 = vld [vmem:[%s721] sm:%s714]
                  %724 = vst [vmem:[%s722] sm:%s714] %v723
                $region311: #{tpu_custom_call.1} parent=305 // loop_footer
                  %s720 = sadd.s32 1, %s716
                $region312: #{tpu_custom_call.1} parent=305 // loop_footer_branch
                  %715 = sbr.rel target = $region308
                $region313: #{tpu_custom_call.1} parent=305 // loop_exit
                  _
              $region306: #{tpu_custom_call.1} parent=290 // pred_fallthru
                _
            $region291: #{tpu_custom_call.1} parent=286 // pred_fallthru
              _
            // Predicated region
            $region292: #{tpu_custom_call.1} parent=286 // pred_check
              _
            $region293: #{tpu_custom_call.1} parent=286 // pred_check_branch
              %698 = sbr.rel (0) target = $region295
            $region294: #{tpu_custom_call.1} parent=286 // pred_region
              %s700 = ssub.s32 2, 1
              loop: start=0, step=1, limit=1
              $region296: #{tpu_custom_call.1} parent=294 // loop_pre_header
                _
              $region297: #{tpu_custom_call.1} parent=294 // loop_header
                %s702 = sphi 0, %s706
                %p703 = scmp.ge.s32.totalorder %s702, 1
                %s707 = sphi %s692, %s692
                %s708 = sphi %s693, %s693
              $region298: #{tpu_custom_call.1} parent=294 // loop_header_branch
                %705 = sbr.rel (%p703) target = $region302
              $region299: #{tpu_custom_call.1} parent=294 // loop_body
                %v709 = vld [vmem:[%s707] sm:%s700]
                %710 = vst [vmem:[%s708] sm:%s700] %v709
              $region300: #{tpu_custom_call.1} parent=294 // loop_footer
                %s706 = sadd.s32 1, %s702
              $region301: #{tpu_custom_call.1} parent=294 // loop_footer_branch
                %701 = sbr.rel target = $region297
              $region302: #{tpu_custom_call.1} parent=294 // loop_exit
                _
            $region295: #{tpu_custom_call.1} parent=286 // pred_fallthru
              _
            // Predicated region
            $region314: #{tpu_custom_call.1} parent=286 // pred_check
              _
            $region315: #{tpu_custom_call.1} parent=286 // pred_check_branch
              %727 = sbr.rel (0) target = $region317
            $region316: #{tpu_custom_call.1} parent=286 // pred_region
              %728 = vsyncadd %s694, 16
            $region317: #{tpu_custom_call.1} parent=286 // pred_fallthru
              _
          $region287: #{tpu_custom_call.1} parent=280 // pred_fallthru
            _
        $region281: #{tpu_custom_call.1} parent=35 // loop_footer
          %s656 = sadd.s32 1, %s652
        $region282: #{tpu_custom_call.1} parent=35 // loop_footer_branch
          %651 = sbr.rel target = $region278
        $region283: #{tpu_custom_call.1} parent=35 // loop_exit
          _
        %v729 = vld [vmem:[#allocation2] sm:$0xff]
        %vm730 = vcmask 277504
        %v732 = vsel %vm730, %v613, 0
        %vm734 = vcmask 1041408
        %v736 = vsel %vm734, %v650, 0
        %738 = vmatpush.msra.mxu0 %v629
        %739 = vmatpush.msra.mxu0 %v628
        %740 = vmatpush.msra.mxu0 %v627
        %741 = vmatpush.msra.mxu0 %v626
        %742 = vmatpush.msra.mxu0 %v625
        %743 = vmatpush.msra.mxu0 %v624
        %744 = vmatpush.msra.mxu0 %v623
        %745 = vmatpush.msra.mxu0 %v622
        %746 = vmatpush.msra.mxu0 %v621
        %747 = vmatpush.msra.mxu0 %v620
        %748 = vmatpush.msra.mxu0 %v619
        %749 = vmatpush.msra.mxu0 %v618
        %750 = vmatpush.msra.mxu0 %v617
        %751 = vmatpush.msra.mxu0 %v616
        %752 = vmatpush.msra.mxu0 %v615
        %753 = vmatpush.msra.mxu0 %v614
        %754 = vmatmul.f32.gmra.mxu0 %v611
        %v755 = vpop.f32.mrf.mxu0
        %v756 = vadd.f32 %v729, %v755
        %757 = vdwg.mxu0
        %758 = vmatpush.msra.mxu0 %v645
        %759 = vmatpush.msra.mxu0 %v644
        %760 = vmatpush.msra.mxu0 %v643
        %761 = vmatpush.msra.mxu0 %v642
        %762 = vmatpush.msra.mxu0 %v641
        %763 = vmatpush.msra.mxu0 %v640
        %764 = vmatpush.msra.mxu0 %v639
        %765 = vmatpush.msra.mxu0 %v638
        %766 = vmatpush.msra.mxu0 %v637
        %767 = vmatpush.msra.mxu0 %v636
        %768 = vmatpush.msra.mxu0 %v635
        %769 = vmatpush.msra.mxu0 %v634
        %770 = vmatpush.msra.mxu0 %v633
        %771 = vmatpush.msra.mxu0 %v632
        %772 = vmatpush.msra.mxu0 %v631
        %773 = vmatpush.msra.mxu0 %v630
        %774 = vmatmul.f32.gmra.mxu0 %v612
        %v775 = vpop.f32.mrf.mxu0
        %v776 = vadd.f32 %v756, %v775
        %777 = vdwg.mxu0
        %778 = vmatpush.msra.mxu0 0.0
        %779 = vmatpush.msra.mxu0 0.0
        %780 = vmatpush.msra.mxu0 0.0
        %781 = vmatpush.msra.mxu0 0.0
        %782 = vmatpush.msra.mxu0 0.0
        %783 = vmatpush.msra.mxu0 0.0
        %784 = vmatpush.msra.mxu0 0.0
        %785 = vmatpush.msra.mxu0 0.0
        %786 = vmatpush.msra.mxu0 0.0
        %787 = vmatpush.msra.mxu0 0.0
        %788 = vmatpush.msra.mxu0 0.0
        %789 = vmatpush.msra.mxu0 %v736
        %790 = vmatpush.msra.mxu0 %v649
        %791 = vmatpush.msra.mxu0 %v648
        %792 = vmatpush.msra.mxu0 %v647
        %793 = vmatpush.msra.mxu0 %v646
        %794 = vmatmul.f32.gmra.mxu0 %v732
        %v795 = vpop.f32.mrf.mxu0
        %v796 = vadd.f32 %v776, %v795
        %797 = vdwg.mxu0
        %vm798 = vcmask 261120
        %v799 = vsel %vm798, %v796, 0.0
        %800 = vadd.xlane.f32.xlu0 %v799
        %v801 = vpop.xlane.xlu0 %800
        %v802 = vrcp.pop 32.0
        %v803 = vmul.f32 32.0, %v802
        %v804 = vsub.f32 1.0, %v803
        %v805 = vmul.f32 %v802, %v804
        %v806 = vadd.f32 %v802, %v805
        %vm807 = vweird.f32 %v802
        %v808 = vsel %vm807, %v802, %v806
        %v809 = vmul.f32 %v801, %v808
        %v810 = vsub.f32 %v796, %v809
        %v811 = vmul.f32 %v810, %v810
        %v812 = vsel %vm798, %v811, 0.0
        %813 = vadd.xlane.f32.xlu0 %v812
        %v814 = vpop.xlane.xlu0 %813
        %v815 = vmul.f32 %v814, %v808
        %v816 = vadd.f32 %v815, 1e-12
        %v817 = vrsqrt.pop %v816
        %v818 = vmul.f32 %v817, %v816
        %v819 = vmul.f32 %v818, %v817
        %v820 = vmul.f32 0.5, %v819
        %v821 = vsub.f32 1.5, %v820
        %v822 = vmul.f32 %v817, %v821
        %vm823 = vweird.f32 %v816
        %vm824 = vweird.f32 %v817
        %vm825 = vmor %vm823, %vm824
        %v826 = vsel %vm825, %v817, %v822
        %v827 = vmul.f32 %v810, %v826
        %v828 = vld [vmem:[%s4] sm:$0x1]
        %v830 = vperm.slane %v828, 0
        %v832 = vmul.f32 %v827, %v830
        %v833 = vld [vmem:[%s5] sm:$0x1]
        %v835 = vperm.slane %v833, 0
        %v837 = vadd.f32 %v832, %v835
        %838 = vst.msk [vmem:[%s198] sm:$0xff] %vm798, %v837
        %s839 = sand.u32 %s125, 1
        %s840 = scalar_lea.sflag [#allocation7], %s839
        %s841 = sand.u32 %s125, 1
        %s842 = smul.addr %s841, 8
        %s843 = scalar_lea.vmem [#allocation6], %s842
        // Predicated region
        $region318: #{tpu_custom_call.1} parent=35 // pred_check
          %p844 = pneg %p135
        $region319: #{tpu_custom_call.1} parent=35 // pred_check_branch
          %846 = sbr.rel (%p844) target = $region321
        $region320: #{tpu_custom_call.1} parent=35 // pred_region
          %848 = vsyncadd %s840, 0
          %s849 = smul.addr %s28, 8
          %s850 = scalar_lea.hbm %s6, %s849
          %s852 = sshll.u32 %s843, 4
          %s853 = int_to_ptr.vmem [resolvable:$true] %s852
          %s854 = sshll.u32 %s850, 4
          %s855 = int_to_ptr.hbm [resolvable:$true] %s854
          %857 = dma.vmem_to_hbm [thread:$0]  %s853, 128, %s855, %s840
        $region321: #{tpu_custom_call.1} parent=35 // pred_fallthru
          _
      $region36: #{tpu_custom_call.1} parent=5 // pred_fallthru
        _
      %p858 = scmp.le.s32.totalorder 2, %s23
      // Predicated region
      $region322: #{tpu_custom_call.1} parent=5 // pred_check
        %p859 = pneg %p858
      $region323: #{tpu_custom_call.1} parent=5 // pred_check_branch
        %861 = sbr.rel (%p859) target = $region325
      $region324: #{tpu_custom_call.1} parent=5 // pred_region
        %s862 = ssub.s32 %s23, 2
        // Predicated region
        $region326: #{tpu_custom_call.1} parent=324 // pred_check
          %p863 = pneg %p141
        $region327: #{tpu_custom_call.1} parent=324 // pred_check_branch
          %865 = sbr.rel (%p863) target = $region329
        $region328: #{tpu_custom_call.1} parent=324 // pred_region
          %s866 = sand.u32 %s126, 1
          %s867 = scalar_lea.sflag [#allocation7], %s866
          %s868 = sand.u32 %s126, 1
          %s869 = smul.addr %s868, 8
          %s870 = scalar_lea.vmem [#allocation6], %s869
          %872 = dma.done %s867, 128
        $region329: #{tpu_custom_call.1} parent=324 // pred_fallthru
          _
      $region325: #{tpu_custom_call.1} parent=5 // pred_fallthru
        _
    $region6: #{tpu_custom_call.1} parent=1 // loop_footer
      %s27 = sadd.s32 1, %s23
    $region7: #{tpu_custom_call.1} parent=1 // loop_footer_branch
      %22 = sbr.rel target = $region3
    $region8: #{tpu_custom_call.1} parent=1 // loop_exit
      _
    %873 = vsyncpa [#allocation7], 1
    %s874 = scalar_lea.sflag [#allocation7], 1
    %875 = vsyncpa %s874, 1
  %876 = vsyncmov [#allocation3]
  %s877 = vpop.sfrf %876
  %p878 = scmp.eq.s32.totalorder %s877, 0
  %p879 = pneg %p878
  %881 = shalt.err (%p879)
  %s882 = scalar_lea.sflag [#allocation3], 1
  %883 = vsyncmov %s882
  %s884 = vpop.sfrf %883
  %p885 = scmp.eq.s32.totalorder %s884, 0
  %p886 = pneg %p885
  %888 = shalt.err (%p886)
  %s889 = scalar_lea.sflag [#allocation3], 2
  %890 = vsyncmov %s889
  %s891 = vpop.sfrf %890
  %p892 = scmp.eq.s32.totalorder %s891, 0
  %p893 = pneg %p892
  %895 = shalt.err (%p893)
  %s896 = scalar_lea.sflag [#allocation3], 3
  %897 = vsyncmov %s896
  %s898 = vpop.sfrf %897
  %p899 = scmp.eq.s32.totalorder %s898, 0
  %p900 = pneg %p899
  %902 = shalt.err (%p900)
  %s903 = scalar_lea.sflag [#allocation3], 4
  %904 = vsyncmov %s903
  %s905 = vpop.sfrf %904
  %p906 = scmp.eq.s32.totalorder %s905, 0
  %p907 = pneg %p906
  %909 = shalt.err (%p907)
  %s910 = scalar_lea.sflag [#allocation3], 5
  %911 = vsyncmov %s910
  %s912 = vpop.sfrf %911
  %p913 = scmp.eq.s32.totalorder %s912, 0
  %p914 = pneg %p913
  %916 = shalt.err (%p914)
  %s917 = scalar_lea.sflag [#allocation3], 6
  %918 = vsyncmov %s917
  %s919 = vpop.sfrf %918
  %p920 = scmp.eq.s32.totalorder %s919, 0
  %p921 = pneg %p920
  %923 = shalt.err (%p921)
  %s924 = scalar_lea.sflag [#allocation3], 7
  %925 = vsyncmov %s924
  %s926 = vpop.sfrf %925
  %p927 = scmp.eq.s32.totalorder %s926, 0
  %p928 = pneg %p927
  %930 = shalt.err (%p928)

</llo_original>
